<compile_context>
chip_gen: v7x
topology: tpu7x:2x2x1
jax: 0.10.0
libtpu: 0.0.40
codegen_flags: <defaults>
</compile_context>

<pallas_src>
import jax
import jax.numpy as jnp
from jax.experimental import pallas as pl
from jax.experimental.pallas import tpu as pltpu


def mlp_kernel(x_ref,
               w1_ref, b1_ref,
               w2_ref, b2_ref,
               w3_ref, b3_ref,
               w4_ref, b4_ref,
               w5_ref, b5_ref,
               o_ref):
    h = x_ref[...]                                            # (tB, in) f32
    for w_ref, b_ref in ((w1_ref, b1_ref), (w2_ref, b2_ref),
                         (w3_ref, b3_ref), (w4_ref, b4_ref)):
        # bf16 MXU inputs (weights pre-cast in prepare_params), f32 accumulation;
        # bias + ReLU on the f32 VPU path (valid on v5e: no bf16 VALU).
        h = jnp.dot(h.astype(jnp.bfloat16), w_ref[...],
                    preferred_element_type=jnp.float32)
        h = jnp.maximum(h + b_ref[...], 0.0)
    # fc5: out_features == 1 -> VPU multiply + lane reduction (skip the MXU).
    col = jnp.sum(h * w5_ref[...], axis=-1, keepdims=True) + b5_ref[...]  # (tB, 1)
    # Emit lane-dense: (tB,1) -> (1,1,tB) relayout goes to the XLU (has slack),
    # turning tB masked single-lane stores into a full-lane vst.
    o_ref[...] = col.reshape(1, 1, -1).astype(o_ref.dtype)


def _round_up(n, m):
    return ((n + m - 1) // m) * m


def _choose_batch_tile(B, batch_tile):
    if B <= 8:
        return B                                   # block == full dim (legal)
    tB = min(batch_tile, _round_up(B, 8))
    tB = max(8, (tB // 8) * 8)                     # sublane multiple of 8
    # Guarantee >= 2 grid steps so the "parallel" batch axis can shard across
    # both v7x TensorCores (no-op cost on single-TC v5e/v6e).
    if pl.cdiv(B, tB) < 2:
        tB = max(8, _round_up(pl.cdiv(B, 2), 8))
    return tB


def prepare_params(params):
    """One-time parameter prep (call once, outside the forward):
    fc1..fc4 weights in bf16 (halves HBM weight traffic into the kernel),
    fc5 weight as a (1, 128) f32 row for the VPU reduce, biases f32."""
    (w1, b1), (w2, b2), (w3, b3), (w4, b4), (w5, b5) = params
    return [
        (w1.astype(jnp.bfloat16), b1.astype(jnp.float32)),
        (w2.astype(jnp.bfloat16), b2.astype(jnp.float32)),
        (w3.astype(jnp.bfloat16), b3.astype(jnp.float32)),
        (w4.astype(jnp.bfloat16), b4.astype(jnp.float32)),
        (w5.reshape(1, -1).astype(jnp.float32), b5.astype(jnp.float32)),
    ]


def simple_mlp_forward(x, prepped_params, *, batch_tile=512):
    """x: (B, input_size) f32.  prepped_params: output of prepare_params()."""
    B, in_dim = x.shape
    (w1, b1), (w2, b2), (w3, b3), (w4, b4), (w5, b5) = prepped_params

    tB = _choose_batch_tile(B, batch_tile)
    num_tiles = pl.cdiv(B, tB)   # ragged last tile: OOB input rows are don't-care,
                                 # their outputs are discarded by the slice below.

    weight_args = (w1, b1, w2, b2, w3, b3, w4, b4, w5, b5)

    def resident_spec(a):
        # Same block index every grid step -> DMA'd once, stays VMEM-resident.
        return pl.BlockSpec(a.shape, lambda i: (0, 0))

    in_specs = [pl.BlockSpec((tB, in_dim), lambda i: (i, 0))]
    in_specs += [resident_spec(a) for a in weight_args]
    # Lane-dense output: one (1, 1, tB) row per batch tile.
    out_specs = pl.BlockSpec((1, 1, tB), lambda i: (i, 0, 0))

    flops = 2 * B * sum(int(w.shape[0]) * int(w.shape[1])
                        for w, _ in prepped_params)
    bytes_accessed = (int(x.size) * x.dtype.itemsize
                      + sum(int(a.size) * a.dtype.itemsize for a in weight_args)
                      + num_tiles * tB * 4)
    cost = pl.CostEstimate(flops=flops, transcendentals=0,
                           bytes_accessed=int(bytes_accessed))

    out = pl.pallas_call(
        mlp_kernel,
        out_shape=jax.ShapeDtypeStruct((num_tiles, 1, tB), jnp.float32),
        grid=(num_tiles,),
        in_specs=in_specs,
        out_specs=out_specs,
        compiler_params=pltpu.CompilerParams(
            # Batch tiles are independent -> shard across both v7x TCs.
            dimension_semantics=("parallel",)),
        cost_estimate=cost,
    )(x, *weight_args)

    return out.reshape(num_tiles * tB, 1)[:B]


def init_linear(key, fan_in, fan_out):
    """Deterministic init mimicking PyTorch's default uniform(-1/sqrt(fan_in), ...)."""
    kw, kb = jax.random.split(key)
    bound = 1.0 / jnp.sqrt(fan_in)
    # Stored as (in, out), i.e. transpose of PyTorch's (out, in) weight.
    w = jax.random.uniform(kw, (fan_in, fan_out), jnp.float32, -bound, bound)
    b = jax.random.uniform(kb, (1, fan_out), jnp.float32, -bound, bound)
    return w, b


def make_params(input_size, key):
    dims = [input_size, 1024, 512, 256, 128, 1]
    keys = jax.random.split(key, len(dims) - 1)
    return [init_linear(k, dims[i], dims[i + 1]) for i, k in enumerate(keys)]


def reference_forward(x, params):
    """Pure-jnp reference with the same mixed-precision policy as the kernel.
    (bf16 fc1..fc4 will not bit-match a pure-f32 PyTorch SimpleMLP.)"""
    h = x
    n = len(params)
    for i, (w, b) in enumerate(params):
        if i < n - 1:
            h = jnp.dot(h.astype(jnp.bfloat16), w.astype(jnp.bfloat16),
                        preferred_element_type=jnp.float32)
            h = jnp.maximum(h + b, 0.0)
        else:
            h = jnp.dot(h, w, preferred_element_type=jnp.float32) + b
    return h


if __name__ == "__main__":
    input_size = 32
    batch = 16

    key = jax.random.PRNGKey(0)
    kx, kp = jax.random.split(key)
    x = jax.random.normal(kx, (batch, input_size), jnp.float32)
    params = make_params(input_size, kp)

    # One-time bf16 weight prep, outside the forward call (no per-call cast).
    prepped = prepare_params(params)
    jax.block_until_ready(prepped)

    # batch_tile=8 -> grid=(2,): exercises batch tiling + resident weights
    # + lane-dense output path.
    out = simple_mlp_forward(x, prepped, batch_tile=8)
    jax.block_until_ready(out)

    ref = reference_forward(x, params)
    assert out.shape == (batch, 1), out.shape
    err = float(jnp.max(jnp.abs(out - ref)))
    assert jnp.allclose(out, ref, atol=2e-3, rtol=2e-3), err

    print("KERNEL_OK")
</pallas_src>

<mosaic_0001>
module attributes {stable_mosaic.version = 11 : i64} {
  func.func @mlp_kernel(%arg0: i32, %arg1: memref<8x32xf32, #tpu.memory_space<vmem>>, %arg2: memref<32x1024xbf16, #tpu.memory_space<vmem>>, %arg3: memref<1x1024xf32, #tpu.memory_space<vmem>>, %arg4: memref<1024x512xbf16, #tpu.memory_space<vmem>>, %arg5: memref<1x512xf32, #tpu.memory_space<vmem>>, %arg6: memref<512x256xbf16, #tpu.memory_space<vmem>>, %arg7: memref<1x256xf32, #tpu.memory_space<vmem>>, %arg8: memref<256x128xbf16, #tpu.memory_space<vmem>>, %arg9: memref<1x128xf32, #tpu.memory_space<vmem>>, %arg10: memref<1x128xf32, #tpu.memory_space<vmem>>, %arg11: memref<1x1xf32, #tpu.memory_space<vmem>>, %arg12: memref<1x1x8xf32, #tpu.memory_space<vmem>>) attributes {dimension_semantics = [#tpu.dimension_semantics<parallel>], iteration_bounds = array<i64: 2>, scalar_prefetch = 0 : i64, scratch_operands = 0 : i64, tpu.core_type = #tpu.core_type<tc>, window_params = [{transform_indices = @transform_0, window_bounds = array<i64: 8, 32>}, {pipeline_mode = #tpu.pipeline_mode<synchronous>, transform_indices = @transform_1, window_bounds = array<i64: 32, 1024>}, {pipeline_mode = #tpu.pipeline_mode<synchronous>, transform_indices = @transform_2, window_bounds = array<i64: 1, 1024>}, {pipeline_mode = #tpu.pipeline_mode<synchronous>, transform_indices = @transform_3, window_bounds = array<i64: 1024, 512>}, {pipeline_mode = #tpu.pipeline_mode<synchronous>, transform_indices = @transform_4, window_bounds = array<i64: 1, 512>}, {pipeline_mode = #tpu.pipeline_mode<synchronous>, transform_indices = @transform_5, window_bounds = array<i64: 512, 256>}, {pipeline_mode = #tpu.pipeline_mode<synchronous>, transform_indices = @transform_6, window_bounds = array<i64: 1, 256>}, {pipeline_mode = #tpu.pipeline_mode<synchronous>, transform_indices = @transform_7, window_bounds = array<i64: 256, 128>}, {pipeline_mode = #tpu.pipeline_mode<synchronous>, transform_indices = @transform_8, window_bounds = array<i64: 1, 128>}, {pipeline_mode = #tpu.pipeline_mode<synchronous>, transform_indices = @transform_9, window_bounds = array<i64: 1, 128>}, {pipeline_mode = #tpu.pipeline_mode<synchronous>, transform_indices = @transform_10, window_bounds = array<i64: 1, 1>}, {transform_indices = @transform_11, window_bounds = array<i64: 1, 1, 8>}]} {
    %c0 = arith.constant 0 : index
    %c0_0 = arith.constant 0 : index
    %0 = vector.load %arg1[%c0, %c0_0] : memref<8x32xf32, #tpu.memory_space<vmem>>, vector<8x32xf32>
    %1 = arith.truncf %0 : vector<8x32xf32> to vector<8x32xbf16>
    %c0_1 = arith.constant 0 : index
    %c0_2 = arith.constant 0 : index
    %2 = vector.load %arg2[%c0_1, %c0_2] : memref<32x1024xbf16, #tpu.memory_space<vmem>>, vector<32x1024xbf16>
    %cst = arith.constant dense<0.000000e+00> : vector<8x1024xf32>
    %3 = tpu.matmul %1, %2, %cst {dimension_numbers = #tpu.dot_dimension_numbers<[1], [0], [0], [1], [0, 0, 1, 1], [], []>} : vector<8x32xbf16>, vector<32x1024xbf16>, vector<8x1024xf32> -> vector<8x1024xf32>
    %c0_3 = arith.constant 0 : index
    %c0_4 = arith.constant 0 : index
    %4 = vector.load %arg3[%c0_3, %c0_4] : memref<1x1024xf32, #tpu.memory_space<vmem>>, vector<1x1024xf32>
    %5 = vector.broadcast %4 : vector<1x1024xf32> to vector<8x1024xf32>
    %6 = arith.addf %3, %5 : vector<8x1024xf32>
    %cst_5 = arith.constant 0.000000e+00 : f32
    %7 = vector.broadcast %cst_5 : f32 to vector<8x1024xf32>
    %8 = arith.maximumf %6, %7 : vector<8x1024xf32>
    %9 = arith.truncf %8 : vector<8x1024xf32> to vector<8x1024xbf16>
    %c0_6 = arith.constant 0 : index
    %c0_7 = arith.constant 0 : index
    %10 = vector.load %arg4[%c0_6, %c0_7] : memref<1024x512xbf16, #tpu.memory_space<vmem>>, vector<1024x512xbf16>
    %cst_8 = arith.constant dense<0.000000e+00> : vector<8x512xf32>
    %11 = tpu.matmul %9, %10, %cst_8 {dimension_numbers = #tpu.dot_dimension_numbers<[1], [0], [0], [1], [0, 0, 1, 1], [], []>} : vector<8x1024xbf16>, vector<1024x512xbf16>, vector<8x512xf32> -> vector<8x512xf32>
    %c0_9 = arith.constant 0 : index
    %c0_10 = arith.constant 0 : index
    %12 = vector.load %arg5[%c0_9, %c0_10] : memref<1x512xf32, #tpu.memory_space<vmem>>, vector<1x512xf32>
    %13 = vector.broadcast %12 : vector<1x512xf32> to vector<8x512xf32>
    %14 = arith.addf %11, %13 : vector<8x512xf32>
    %cst_11 = arith.constant 0.000000e+00 : f32
    %15 = vector.broadcast %cst_11 : f32 to vector<8x512xf32>
    %16 = arith.maximumf %14, %15 : vector<8x512xf32>
    %17 = arith.truncf %16 : vector<8x512xf32> to vector<8x512xbf16>
    %c0_12 = arith.constant 0 : index
    %c0_13 = arith.constant 0 : index
    %18 = vector.load %arg6[%c0_12, %c0_13] : memref<512x256xbf16, #tpu.memory_space<vmem>>, vector<512x256xbf16>
    %cst_14 = arith.constant dense<0.000000e+00> : vector<8x256xf32>
    %19 = tpu.matmul %17, %18, %cst_14 {dimension_numbers = #tpu.dot_dimension_numbers<[1], [0], [0], [1], [0, 0, 1, 1], [], []>} : vector<8x512xbf16>, vector<512x256xbf16>, vector<8x256xf32> -> vector<8x256xf32>
    %c0_15 = arith.constant 0 : index
    %c0_16 = arith.constant 0 : index
    %20 = vector.load %arg7[%c0_15, %c0_16] : memref<1x256xf32, #tpu.memory_space<vmem>>, vector<1x256xf32>
    %21 = vector.broadcast %20 : vector<1x256xf32> to vector<8x256xf32>
    %22 = arith.addf %19, %21 : vector<8x256xf32>
    %cst_17 = arith.constant 0.000000e+00 : f32
    %23 = vector.broadcast %cst_17 : f32 to vector<8x256xf32>
    %24 = arith.maximumf %22, %23 : vector<8x256xf32>
    %25 = arith.truncf %24 : vector<8x256xf32> to vector<8x256xbf16>
    %c0_18 = arith.constant 0 : index
    %c0_19 = arith.constant 0 : index
    %26 = vector.load %arg8[%c0_18, %c0_19] : memref<256x128xbf16, #tpu.memory_space<vmem>>, vector<256x128xbf16>
    %cst_20 = arith.constant dense<0.000000e+00> : vector<8x128xf32>
    %27 = tpu.matmul %25, %26, %cst_20 {dimension_numbers = #tpu.dot_dimension_numbers<[1], [0], [0], [1], [0, 0, 1, 1], [], []>} : vector<8x256xbf16>, vector<256x128xbf16>, vector<8x128xf32> -> vector<8x128xf32>
    %c0_21 = arith.constant 0 : index
    %c0_22 = arith.constant 0 : index
    %28 = vector.load %arg9[%c0_21, %c0_22] : memref<1x128xf32, #tpu.memory_space<vmem>>, vector<1x128xf32>
    %29 = vector.broadcast %28 : vector<1x128xf32> to vector<8x128xf32>
    %30 = arith.addf %27, %29 : vector<8x128xf32>
    %cst_23 = arith.constant 0.000000e+00 : f32
    %31 = vector.broadcast %cst_23 : f32 to vector<8x128xf32>
    %32 = arith.maximumf %30, %31 : vector<8x128xf32>
    %c0_24 = arith.constant 0 : index
    %c0_25 = arith.constant 0 : index
    %33 = vector.load %arg10[%c0_24, %c0_25] : memref<1x128xf32, #tpu.memory_space<vmem>>, vector<1x128xf32>
    %34 = vector.broadcast %33 : vector<1x128xf32> to vector<8x128xf32>
    %35 = arith.mulf %32, %34 : vector<8x128xf32>
    %cst_26 = arith.constant dense<0.000000e+00> : vector<8xf32>
    %36 = vector.multi_reduction <add>, %35, %cst_26 [1] : vector<8x128xf32> to vector<8xf32>
    %37 = vector.shape_cast %36 : vector<8xf32> to vector<8x1xf32>
    %c0_27 = arith.constant 0 : index
    %c0_28 = arith.constant 0 : index
    %38 = vector.load %arg11[%c0_27, %c0_28] : memref<1x1xf32, #tpu.memory_space<vmem>>, vector<1x1xf32>
    %39 = vector.broadcast %38 : vector<1x1xf32> to vector<8x1xf32>
    %40 = arith.addf %37, %39 : vector<8x1xf32>
    %41 = vector.shape_cast %40 : vector<8x1xf32> to vector<1x1x8xf32>
    %c0_29 = arith.constant 0 : index
    %c0_30 = arith.constant 0 : index
    %c0_31 = arith.constant 0 : index
    %42 = vector.load %arg12[%c0_29, %c0_30, %c0_31] : memref<1x1x8xf32, #tpu.memory_space<vmem>>, vector<1x1x8xf32>
    tpu.vector_store %arg12[%c0_29, %c0_30, %c0_31], %41 {strides = array<i32>} : memref<1x1x8xf32, #tpu.memory_space<vmem>>, vector<1x1x8xf32>,
    return
  }
  func.func @transform_0(%arg0: i32) -> (i32, i32) {
    %c0_i32 = arith.constant 0 : i32
    %c0_i32_0 = arith.constant 0 : i32
    return %arg0, %c0_i32 : i32, i32
  }
  func.func @transform_1(%arg0: i32) -> (i32, i32) {
    %c0_i32 = arith.constant 0 : i32
    %c0_i32_0 = arith.constant 0 : i32
    %c0_i32_1 = arith.constant 0 : i32
    return %c0_i32, %c0_i32_0 : i32, i32
  }
  func.func @transform_2(%arg0: i32) -> (i32, i32) {
    %c0_i32 = arith.constant 0 : i32
    %c0_i32_0 = arith.constant 0 : i32
    %c0_i32_1 = arith.constant 0 : i32
    return %c0_i32, %c0_i32_0 : i32, i32
  }
  func.func @transform_3(%arg0: i32) -> (i32, i32) {
    %c0_i32 = arith.constant 0 : i32
    %c0_i32_0 = arith.constant 0 : i32
    %c0_i32_1 = arith.constant 0 : i32
    return %c0_i32, %c0_i32_0 : i32, i32
  }
  func.func @transform_4(%arg0: i32) -> (i32, i32) {
    %c0_i32 = arith.constant 0 : i32
    %c0_i32_0 = arith.constant 0 : i32
    %c0_i32_1 = arith.constant 0 : i32
    return %c0_i32, %c0_i32_0 : i32, i32
  }
  func.func @transform_5(%arg0: i32) -> (i32, i32) {
    %c0_i32 = arith.constant 0 : i32
    %c0_i32_0 = arith.constant 0 : i32
    %c0_i32_1 = arith.constant 0 : i32
    return %c0_i32, %c0_i32_0 : i32, i32
  }
  func.func @transform_6(%arg0: i32) -> (i32, i32) {
    %c0_i32 = arith.constant 0 : i32
    %c0_i32_0 = arith.constant 0 : i32
    %c0_i32_1 = arith.constant 0 : i32
    return %c0_i32, %c0_i32_0 : i32, i32
  }
  func.func @transform_7(%arg0: i32) -> (i32, i32) {
    %c0_i32 = arith.constant 0 : i32
    %c0_i32_0 = arith.constant 0 : i32
    %c0_i32_1 = arith.constant 0 : i32
    return %c0_i32, %c0_i32_0 : i32, i32
  }
  func.func @transform_8(%arg0: i32) -> (i32, i32) {
    %c0_i32 = arith.constant 0 : i32
    %c0_i32_0 = arith.constant 0 : i32
    %c0_i32_1 = arith.constant 0 : i32
    return %c0_i32, %c0_i32_0 : i32, i32
  }
  func.func @transform_9(%arg0: i32) -> (i32, i32) {
    %c0_i32 = arith.constant 0 : i32
    %c0_i32_0 = arith.constant 0 : i32
    %c0_i32_1 = arith.constant 0 : i32
    return %c0_i32, %c0_i32_0 : i32, i32
  }
  func.func @transform_10(%arg0: i32) -> (i32, i32) {
    %c0_i32 = arith.constant 0 : i32
    %c0_i32_0 = arith.constant 0 : i32
    %c0_i32_1 = arith.constant 0 : i32
    return %c0_i32, %c0_i32_0 : i32, i32
  }
  func.func @transform_11(%arg0: i32) -> (i32, i32, i32) {
    %c0_i32 = arith.constant 0 : i32
    %c0_i32_0 = arith.constant 0 : i32
    %c0_i32_1 = arith.constant 0 : i32
    return %arg0, %c0_i32, %c0_i32_0 : i32, i32, i32
  }
}

</mosaic_0001>

<llo_original>
// kernel: tpu_custom_call.1
$region0: #{tpu_custom_call.1}
  #allocation0 [shape = 'u32[]', space=smem, size = 0x4, offset = 0x4, fixed_abs, tag = 'smem constant byte address 0x4 - core index']
  #allocation1 [shape = 'u32[144,128]{1,0:T(1,128)}', space=vmem, size = 0x12000, scoped, tag = 'internal scratch']
  #allocation2 [shape = 'f32[1,1]{1,0:T(1,128)S(1)}', space=vmem, size = 0x200, scoped, tag = 'scoped memory for tpu_custom_call.1']
  %s0 = inlined_call_operand.hbm [shape: f32[16,32], index: 0, kind: input, shape index: {}]
  %s1 = inlined_call_operand.hbm [shape: bf16[32,1024], index: 1, kind: input, shape index: {}]
  %s2 = inlined_call_operand.vmem [shape: f32[1,1024], index: 2, kind: input, shape index: {}]
  %s3 = inlined_call_operand.hbm [shape: bf16[1024,512], index: 3, kind: input, shape index: {}]
  %s4 = inlined_call_operand.vmem [shape: f32[1,512], index: 4, kind: input, shape index: {}]
  %s5 = inlined_call_operand.hbm [shape: bf16[512,256], index: 5, kind: input, shape index: {}]
  %s6 = inlined_call_operand.vmem [shape: f32[1,256], index: 6, kind: input, shape index: {}]
  %s7 = inlined_call_operand.hbm [shape: bf16[256,128], index: 7, kind: input, shape index: {}]
  %s8 = inlined_call_operand.vmem [shape: f32[1,128], index: 8, kind: input, shape index: {}]
  %s9 = inlined_call_operand.vmem [shape: f32[1,128], index: 9, kind: input, shape index: {}]
  %s10 = inlined_call_operand.<no memory space> [shape: f32[1,1], index: 10, kind: input, shape index: {}]
  %s11 = inlined_call_operand.hbm [shape: f32[2,1,8], index: 11, kind: output, shape index: {}]
  %s12 = sld [smem:[#allocation0]]
  $region97: #{tpu_custom_call.1} parent=0
    _
  %s14 = ssub.s32 1, %s12
  %s15 = scalar_select 0, %s14, %s12
  %v16 = vstv %s10
  %17 = vst [vmem:[#allocation2] sm:$0x1] %v16
  $region1: #{tpu_custom_call.1} parent=0
    #allocation3 [shape = 'u8[8192]{0}', space=vmem, size = 0x2000, scoped, tag = 'input window, operand 0']
    #allocation4 [shape = 's32[2]{0}', space=sflag, size = 0x8, scoped, tag = 'scoped memory for tpu_custom_call.1']
    #allocation5 [shape = 's32[2]{0}', space=sflag, size = 0x8, scoped, tag = 'scoped memory for tpu_custom_call.1']
    #allocation6 [shape = 'u8[65536]{0}', space=vmem, size = 0x10000, scoped, tag = 'input window, operand 1, single buffered']
    #allocation7 [shape = 's32[1]{0}', space=sflag, size = 0x4, scoped, tag = 'scoped memory for tpu_custom_call.1']
    #allocation8 [shape = 'u8[1048576]{0}', space=vmem, size = 0x100000, scoped, tag = 'input window, operand 3, single buffered']
    #allocation9 [shape = 'u8[262144]{0}', space=vmem, size = 0x40000, scoped, tag = 'input window, operand 5, single buffered']
    #allocation10 [shape = 's32[1]{0}', space=sflag, size = 0x4, scoped, tag = 'scoped memory for tpu_custom_call.1']
    #allocation11 [shape = 'u8[65536]{0}', space=vmem, size = 0x10000, scoped, tag = 'input window, operand 7, single buffered']
    #allocation12 [shape = 'u8[1024]{0}', space=vmem, size = 0x400, scoped, tag = 'output window, operand 0']
    %18 = vsyncpa [#allocation4], 0
    %s19 = scalar_lea.sflag [#allocation4], 1
    %20 = vsyncpa %s19, 0
    %21 = vsyncpa [#allocation7], 0
    %22 = vsyncpa [#allocation10], 0
    %23 = vsyncpa [#allocation5], 0
    %s24 = scalar_lea.sflag [#allocation5], 1
    %25 = vsyncpa %s24, 0
    loop: start=0, step=1, limit=4
    $region2: #{tpu_custom_call.1} parent=1 // loop_pre_header
      _
    $region3: #{tpu_custom_call.1} parent=1 // loop_header
      %s27 = sphi 0, %s31
      %p28 = scmp.ge.s32.totalorder %s27, 4
      %s37 = sphi 0, %s39
      %s40 = sphi 0, %s37
      %s41 = sphi 0, %s40
      %s57 = sphi 0, %s41
      %s61 = sphi 0, %s61
      %s63 = sphi 0, %s61
      %s64 = sphi 0, %s63
      %s78 = sphi 0, %s64
      %s82 = sphi 0, %s82
      %s84 = sphi 0, %s82
      %s85 = sphi 0, %s84
      %s99 = sphi 0, %s85
      %s103 = sphi 0, %s103
      %s105 = sphi 0, %s103
      %s106 = sphi 0, %s105
      %s120 = sphi 0, %s106
      %s124 = sphi 0, %s124
      %s126 = sphi 0, %s124
      %s127 = sphi 0, %s126
      %s141 = sphi 0, %s127
      %s145 = sphi 0, %s145
      %s147 = sphi 0, %s145
      %s148 = sphi 0, %s147
      %s162 = sphi 0, %s148
      %s166 = sphi 0, %s166
      %s168 = sphi 0, %s166
      %s169 = sphi 0, %s168
      %s183 = sphi 0, %s169
      %s187 = sphi 0, %s187
      %s189 = sphi 0, %s187
      %s190 = sphi 0, %s189
      %s204 = sphi 0, %s190
      %s208 = sphi 0, %s208
      %s210 = sphi 0, %s208
      %s211 = sphi 0, %s210
      %s225 = sphi 0, %s211
      %s229 = sphi 0, %s229
      %s231 = sphi 0, %s229
      %s232 = sphi 0, %s231
      %s246 = sphi 0, %s232
      %s250 = sphi 0, %s250
      %s252 = sphi 0, %s250
      %s253 = sphi 0, %s252
      %s267 = sphi 0, %s253
      %s273 = sphi 0, %s275
      %s276 = sphi 0, %s273
      %s277 = sphi 0, %s276
      %s293 = sphi 0, %s277
    $region4: #{tpu_custom_call.1} parent=1 // loop_header_branch
      %30 = sbr.rel (%p28) target = $region8
    $region5: #{tpu_custom_call.1} parent=1 // loop_body
      %s32 = ssub.s32 %s27, 1
      %s33 = ssub.s32 %s27, 2
      %s34 = sadd.s32 %s27, 1
      %s35 = ssub.s32 %s27, %s34
      %p36 = scmp.eq.s32.totalorder %s35, 0
      %s38 = sadd.s32 %s37, 1
      %s39 = scalar_select %p36, %s37, %s38
      %p42 = pneg %p36
      %p43 = scmp.eq.s32.totalorder %s27, 1
      %p44 = por %p42, %p43
      %p45 = scmp.ne.s32.totalorder %s37, %s40
      %p46 = scmp.eq.s32.totalorder %s27, 0
      %p47 = por %p45, %p46
      %p48 = scmp.ne.s32.totalorder %s37, %s40
      %p49 = scmp.eq.s32.totalorder %s32, 1
      %p50 = por %p48, %p49
      %p51 = scmp.ne.s32.totalorder %s40, %s41
      %p52 = scmp.eq.s32.totalorder %s32, 0
      %p53 = por %p51, %p52
      %p54 = scmp.ne.s32.totalorder %s40, %s41
      %p55 = scmp.eq.s32.totalorder %s33, 1
      %p56 = por %p54, %p55
      %p58 = scmp.ne.s32.totalorder %s41, %s57
      %p59 = scmp.eq.s32.totalorder %s33, 0
      %p60 = por %p58, %p59
      %s62 = sadd.s32 %s61, 1
      %p65 = scmp.eq.s32.totalorder %s27, 1
      %p66 = scmp.ne.s32.totalorder %s61, %s63
      %p67 = scmp.eq.s32.totalorder %s27, 0
      %p68 = por %p66, %p67
      %p69 = scmp.ne.s32.totalorder %s61, %s63
      %p70 = scmp.eq.s32.totalorder %s32, 1
      %p71 = por %p69, %p70
      %p72 = scmp.ne.s32.totalorder %s63, %s64
      %p73 = scmp.eq.s32.totalorder %s32, 0
      %p74 = por %p72, %p73
      %p75 = scmp.ne.s32.totalorder %s63, %s64
      %p76 = scmp.eq.s32.totalorder %s33, 1
      %p77 = por %p75, %p76
      %p79 = scmp.ne.s32.totalorder %s64, %s78
      %p80 = scmp.eq.s32.totalorder %s33, 0
      %p81 = por %p79, %p80
      %s83 = sadd.s32 %s82, 1
      %p86 = scmp.eq.s32.totalorder %s27, 1
      %p87 = scmp.ne.s32.totalorder %s82, %s84
      %p88 = scmp.eq.s32.totalorder %s27, 0
      %p89 = por %p87, %p88
      %p90 = scmp.ne.s32.totalorder %s82, %s84
      %p91 = scmp.eq.s32.totalorder %s32, 1
      %p92 = por %p90, %p91
      %p93 = scmp.ne.s32.totalorder %s84, %s85
      %p94 = scmp.eq.s32.totalorder %s32, 0
      %p95 = por %p93, %p94
      %p96 = scmp.ne.s32.totalorder %s84, %s85
      %p97 = scmp.eq.s32.totalorder %s33, 1
      %p98 = por %p96, %p97
      %p100 = scmp.ne.s32.totalorder %s85, %s99
      %p101 = scmp.eq.s32.totalorder %s33, 0
      %p102 = por %p100, %p101
      %s104 = sadd.s32 %s103, 1
      %p107 = scmp.eq.s32.totalorder %s27, 1
      %p108 = scmp.ne.s32.totalorder %s103, %s105
      %p109 = scmp.eq.s32.totalorder %s27, 0
      %p110 = por %p108, %p109
      %p111 = scmp.ne.s32.totalorder %s103, %s105
      %p112 = scmp.eq.s32.totalorder %s32, 1
      %p113 = por %p111, %p112
      %p114 = scmp.ne.s32.totalorder %s105, %s106
      %p115 = scmp.eq.s32.totalorder %s32, 0
      %p116 = por %p114, %p115
      %p117 = scmp.ne.s32.totalorder %s105, %s106
      %p118 = scmp.eq.s32.totalorder %s33, 1
      %p119 = por %p117, %p118
      %p121 = scmp.ne.s32.totalorder %s106, %s120
      %p122 = scmp.eq.s32.totalorder %s33, 0
      %p123 = por %p121, %p122
      %s125 = sadd.s32 %s124, 1
      %p128 = scmp.eq.s32.totalorder %s27, 1
      %p129 = scmp.ne.s32.totalorder %s124, %s126
      %p130 = scmp.eq.s32.totalorder %s27, 0
      %p131 = por %p129, %p130
      %p132 = scmp.ne.s32.totalorder %s124, %s126
      %p133 = scmp.eq.s32.totalorder %s32, 1
      %p134 = por %p132, %p133
      %p135 = scmp.ne.s32.totalorder %s126, %s127
      %p136 = scmp.eq.s32.totalorder %s32, 0
      %p137 = por %p135, %p136
      %p138 = scmp.ne.s32.totalorder %s126, %s127
      %p139 = scmp.eq.s32.totalorder %s33, 1
      %p140 = por %p138, %p139
      %p142 = scmp.ne.s32.totalorder %s127, %s141
      %p143 = scmp.eq.s32.totalorder %s33, 0
      %p144 = por %p142, %p143
      %s146 = sadd.s32 %s145, 1
      %p149 = scmp.eq.s32.totalorder %s27, 1
      %p150 = scmp.ne.s32.totalorder %s145, %s147
      %p151 = scmp.eq.s32.totalorder %s27, 0
      %p152 = por %p150, %p151
      %p153 = scmp.ne.s32.totalorder %s145, %s147
      %p154 = scmp.eq.s32.totalorder %s32, 1
      %p155 = por %p153, %p154
      %p156 = scmp.ne.s32.totalorder %s147, %s148
      %p157 = scmp.eq.s32.totalorder %s32, 0
      %p158 = por %p156, %p157
      %p159 = scmp.ne.s32.totalorder %s147, %s148
      %p160 = scmp.eq.s32.totalorder %s33, 1
      %p161 = por %p159, %p160
      %p163 = scmp.ne.s32.totalorder %s148, %s162
      %p164 = scmp.eq.s32.totalorder %s33, 0
      %p165 = por %p163, %p164
      %s167 = sadd.s32 %s166, 1
      %p170 = scmp.eq.s32.totalorder %s27, 1
      %p171 = scmp.ne.s32.totalorder %s166, %s168
      %p172 = scmp.eq.s32.totalorder %s27, 0
      %p173 = por %p171, %p172
      %p174 = scmp.ne.s32.totalorder %s166, %s168
      %p175 = scmp.eq.s32.totalorder %s32, 1
      %p176 = por %p174, %p175
      %p177 = scmp.ne.s32.totalorder %s168, %s169
      %p178 = scmp.eq.s32.totalorder %s32, 0
      %p179 = por %p177, %p178
      %p180 = scmp.ne.s32.totalorder %s168, %s169
      %p181 = scmp.eq.s32.totalorder %s33, 1
      %p182 = por %p180, %p181
      %p184 = scmp.ne.s32.totalorder %s169, %s183
      %p185 = scmp.eq.s32.totalorder %s33, 0
      %p186 = por %p184, %p185
      %s188 = sadd.s32 %s187, 1
      %p191 = scmp.eq.s32.totalorder %s27, 1
      %p192 = scmp.ne.s32.totalorder %s187, %s189
      %p193 = scmp.eq.s32.totalorder %s27, 0
      %p194 = por %p192, %p193
      %p195 = scmp.ne.s32.totalorder %s187, %s189
      %p196 = scmp.eq.s32.totalorder %s32, 1
      %p197 = por %p195, %p196
      %p198 = scmp.ne.s32.totalorder %s189, %s190
      %p199 = scmp.eq.s32.totalorder %s32, 0
      %p200 = por %p198, %p199
      %p201 = scmp.ne.s32.totalorder %s189, %s190
      %p202 = scmp.eq.s32.totalorder %s33, 1
      %p203 = por %p201, %p202
      %p205 = scmp.ne.s32.totalorder %s190, %s204
      %p206 = scmp.eq.s32.totalorder %s33, 0
      %p207 = por %p205, %p206
      %s209 = sadd.s32 %s208, 1
      %p212 = scmp.eq.s32.totalorder %s27, 1
      %p213 = scmp.ne.s32.totalorder %s208, %s210
      %p214 = scmp.eq.s32.totalorder %s27, 0
      %p215 = por %p213, %p214
      %p216 = scmp.ne.s32.totalorder %s208, %s210
      %p217 = scmp.eq.s32.totalorder %s32, 1
      %p218 = por %p216, %p217
      %p219 = scmp.ne.s32.totalorder %s210, %s211
      %p220 = scmp.eq.s32.totalorder %s32, 0
      %p221 = por %p219, %p220
      %p222 = scmp.ne.s32.totalorder %s210, %s211
      %p223 = scmp.eq.s32.totalorder %s33, 1
      %p224 = por %p222, %p223
      %p226 = scmp.ne.s32.totalorder %s211, %s225
      %p227 = scmp.eq.s32.totalorder %s33, 0
      %p228 = por %p226, %p227
      %s230 = sadd.s32 %s229, 1
      %p233 = scmp.eq.s32.totalorder %s27, 1
      %p234 = scmp.ne.s32.totalorder %s229, %s231
      %p235 = scmp.eq.s32.totalorder %s27, 0
      %p236 = por %p234, %p235
      %p237 = scmp.ne.s32.totalorder %s229, %s231
      %p238 = scmp.eq.s32.totalorder %s32, 1
      %p239 = por %p237, %p238
      %p240 = scmp.ne.s32.totalorder %s231, %s232
      %p241 = scmp.eq.s32.totalorder %s32, 0
      %p242 = por %p240, %p241
      %p243 = scmp.ne.s32.totalorder %s231, %s232
      %p244 = scmp.eq.s32.totalorder %s33, 1
      %p245 = por %p243, %p244
      %p247 = scmp.ne.s32.totalorder %s232, %s246
      %p248 = scmp.eq.s32.totalorder %s33, 0
      %p249 = por %p247, %p248
      %s251 = sadd.s32 %s250, 1
      %p254 = scmp.eq.s32.totalorder %s27, 1
      %p255 = scmp.ne.s32.totalorder %s250, %s252
      %p256 = scmp.eq.s32.totalorder %s27, 0
      %p257 = por %p255, %p256
      %p258 = scmp.ne.s32.totalorder %s250, %s252
      %p259 = scmp.eq.s32.totalorder %s32, 1
      %p260 = por %p258, %p259
      %p261 = scmp.ne.s32.totalorder %s252, %s253
      %p262 = scmp.eq.s32.totalorder %s32, 0
      %p263 = por %p261, %p262
      %p264 = scmp.ne.s32.totalorder %s252, %s253
      %p265 = scmp.eq.s32.totalorder %s33, 1
      %p266 = por %p264, %p265
      %p268 = scmp.ne.s32.totalorder %s253, %s267
      %p269 = scmp.eq.s32.totalorder %s33, 0
      %p270 = por %p268, %p269
      %s271 = ssub.s32 %s27, %s34
      %p272 = scmp.eq.s32.totalorder %s271, 0
      %s274 = sadd.s32 %s273, 1
      %s275 = scalar_select %p272, %s273, %s274
      %p278 = pneg %p272
      %p279 = scmp.eq.s32.totalorder %s27, 1
      %p280 = por %p278, %p279
      %p281 = scmp.ne.s32.totalorder %s273, %s276
      %p282 = scmp.eq.s32.totalorder %s27, 0
      %p283 = por %p281, %p282
      %p284 = scmp.ne.s32.totalorder %s273, %s276
      %p285 = scmp.eq.s32.totalorder %s32, 1
      %p286 = por %p284, %p285
      %p287 = scmp.ne.s32.totalorder %s276, %s277
      %p288 = scmp.eq.s32.totalorder %s32, 0
      %p289 = por %p287, %p288
      %p290 = scmp.ne.s32.totalorder %s276, %s277
      %p291 = scmp.eq.s32.totalorder %s33, 1
      %p292 = por %p290, %p291
      %p294 = scmp.ne.s32.totalorder %s277, %s293
      %p295 = scmp.eq.s32.totalorder %s33, 0
      %p296 = por %p294, %p295
      %p297 = scmp.le.s32.totalorder 1, %s27
      %p298 = scmp.lt.s32.totalorder %s27, 3
      %p299 = pnand %p297, %p298
      %p300 = pneg %p299
      // Predicated region
      $region9: #{tpu_custom_call.1} parent=5 // pred_check
        _
      $region10: #{tpu_custom_call.1} parent=5 // pred_check_branch
        %302 = sbr.rel (%p299) target = $region12
      $region11: #{tpu_custom_call.1} parent=5 // pred_region
        %s303 = ssub.s32 %s27, 1
        // Predicated region
        $region13: #{tpu_custom_call.1} parent=11 // pred_check
          %p304 = pneg %p74
        $region14: #{tpu_custom_call.1} parent=11 // pred_check_branch
          %306 = sbr.rel (%p304) target = $region16
        $region15: #{tpu_custom_call.1} parent=11 // pred_region
          %s308 = ssub.s32 2048, 2048
          %309 = vsyncadd [#allocation7], %s308
          %s310 = sshll.u32 [#allocation6], 4
          %s311 = int_to_ptr.vmem [resolvable:$true] %s310
          %316 = dma.hbm_to_vmem [thread:$0]  %s1, 2048, %s311, [#allocation7], 512, 512, 32
        $region16: #{tpu_custom_call.1} parent=11 // pred_fallthru
          _
        // Predicated region
        $region17: #{tpu_custom_call.1} parent=11 // pred_check
          %p317 = pneg %p95
        $region18: #{tpu_custom_call.1} parent=11 // pred_check_branch
          %319 = sbr.rel (%p317) target = $region20
        $region19: #{tpu_custom_call.1} parent=11 // pred_region
          _
        $region20: #{tpu_custom_call.1} parent=11 // pred_fallthru
          _
        // Predicated region
        $region21: #{tpu_custom_call.1} parent=11 // pred_check
          %p320 = pneg %p116
        $region22: #{tpu_custom_call.1} parent=11 // pred_check_branch
          %322 = sbr.rel (%p320) target = $region24
        $region23: #{tpu_custom_call.1} parent=11 // pred_region
          %s324 = ssub.s32 32768, 32768
          %325 = vsyncadd [#allocation7], %s324
          %s326 = sshll.u32 [#allocation8], 4
          %s327 = int_to_ptr.vmem [resolvable:$true] %s326
          %332 = dma.hbm_to_vmem [thread:$0]  %s3, 32768, %s327, [#allocation7], 256, 256, 16
        $region24: #{tpu_custom_call.1} parent=11 // pred_fallthru
          _
        // Predicated region
        $region25: #{tpu_custom_call.1} parent=11 // pred_check
          %p333 = pneg %p137
        $region26: #{tpu_custom_call.1} parent=11 // pred_check_branch
          %335 = sbr.rel (%p333) target = $region28
        $region27: #{tpu_custom_call.1} parent=11 // pred_region
          _
        $region28: #{tpu_custom_call.1} parent=11 // pred_fallthru
          _
        // Predicated region
        $region29: #{tpu_custom_call.1} parent=11 // pred_check
          %p336 = pneg %p158
        $region30: #{tpu_custom_call.1} parent=11 // pred_check_branch
          %338 = sbr.rel (%p336) target = $region32
        $region31: #{tpu_custom_call.1} parent=11 // pred_region
          %s340 = ssub.s32 8192, 8192
          %341 = vsyncadd [#allocation10], %s340
          %s342 = sshll.u32 [#allocation9], 4
          %s343 = int_to_ptr.vmem [resolvable:$true] %s342
          %348 = dma.hbm_to_vmem [thread:$0]  %s5, 8192, %s343, [#allocation10], 128, 128, 8
        $region32: #{tpu_custom_call.1} parent=11 // pred_fallthru
          _
        // Predicated region
        $region33: #{tpu_custom_call.1} parent=11 // pred_check
          %p349 = pneg %p179
        $region34: #{tpu_custom_call.1} parent=11 // pred_check_branch
          %351 = sbr.rel (%p349) target = $region36
        $region35: #{tpu_custom_call.1} parent=11 // pred_region
          _
        $region36: #{tpu_custom_call.1} parent=11 // pred_fallthru
          _
        // Predicated region
        $region37: #{tpu_custom_call.1} parent=11 // pred_check
          %p352 = pneg %p200
        $region38: #{tpu_custom_call.1} parent=11 // pred_check_branch
          %354 = sbr.rel (%p352) target = $region40
        $region39: #{tpu_custom_call.1} parent=11 // pred_region
          %s356 = ssub.s32 2048, 2048
          %357 = vsyncadd [#allocation10], %s356
          %s358 = sshll.u32 [#allocation11], 4
          %s359 = int_to_ptr.vmem [resolvable:$true] %s358
          %364 = dma.hbm_to_vmem [thread:$0]  %s7, 2048, %s359, [#allocation10], 64, 64, 4
        $region40: #{tpu_custom_call.1} parent=11 // pred_fallthru
          _
        // Predicated region
        $region41: #{tpu_custom_call.1} parent=11 // pred_check
          %p365 = pneg %p221
        $region42: #{tpu_custom_call.1} parent=11 // pred_check_branch
          %367 = sbr.rel (%p365) target = $region44
        $region43: #{tpu_custom_call.1} parent=11 // pred_region
          _
        $region44: #{tpu_custom_call.1} parent=11 // pred_fallthru
          _
        // Predicated region
        $region45: #{tpu_custom_call.1} parent=11 // pred_check
          %p368 = pneg %p242
        $region46: #{tpu_custom_call.1} parent=11 // pred_check_branch
          %370 = sbr.rel (%p368) target = $region48
        $region47: #{tpu_custom_call.1} parent=11 // pred_region
          _
        $region48: #{tpu_custom_call.1} parent=11 // pred_fallthru
          _
        // Predicated region
        $region49: #{tpu_custom_call.1} parent=11 // pred_check
          %p371 = pneg %p263
        $region50: #{tpu_custom_call.1} parent=11 // pred_check_branch
          %373 = sbr.rel (%p371) target = $region52
        $region51: #{tpu_custom_call.1} parent=11 // pred_region
          _
        $region52: #{tpu_custom_call.1} parent=11 // pred_fallthru
          _
      $region12: #{tpu_custom_call.1} parent=5 // pred_fallthru
        _
      %p374 = scmp.lt.s32.totalorder %s27, 2
      // Predicated region
      $region53: #{tpu_custom_call.1} parent=5 // pred_check
        %p375 = pneg %p374
      $region54: #{tpu_custom_call.1} parent=5 // pred_check_branch
        %377 = sbr.rel (%p375) target = $region56
      $region55: #{tpu_custom_call.1} parent=5 // pred_region
        // Predicated region
        $region57: #{tpu_custom_call.1} parent=55 // pred_check
          %p378 = pneg %p47
        $region58: #{tpu_custom_call.1} parent=55 // pred_check_branch
          %380 = sbr.rel (%p378) target = $region60
        $region59: #{tpu_custom_call.1} parent=55 // pred_region
          %s381 = sand.u32 %s37, 1
          %s382 = scalar_lea.sflag [#allocation4], %s381
          %s383 = sand.u32 %s37, 1
          %s384 = smul.addr %s383, 8
          %s385 = scalar_lea.vmem [#allocation3], %s384
          %s387 = ssub.s32 128, 128
          %388 = vsyncadd %s382, %s387
          %s389 = smul.addr %s27, 128
          %s390 = scalar_lea.hbm %s0, %s389
          %s392 = sshll.u32 %s385, 4
          %s393 = int_to_ptr.vmem [resolvable:$true] %s392
          %395 = dma.hbm_to_vmem [thread:$0]  %s390, 128, %s393, %s382
        $region60: #{tpu_custom_call.1} parent=55 // pred_fallthru
          _
      $region56: #{tpu_custom_call.1} parent=5 // pred_fallthru
        _
      %p396 = scmp.le.s32.totalorder 1, %s27
      %p397 = scmp.lt.s32.totalorder %s27, 3
      %p398 = pnand %p396, %p397
      %p399 = pneg %p398
      // Predicated region
      $region61: #{tpu_custom_call.1} parent=5 // pred_check
        _
      $region62: #{tpu_custom_call.1} parent=5 // pred_check_branch
        %401 = sbr.rel (%p398) target = $region64
      $region63: #{tpu_custom_call.1} parent=5 // pred_region
        %s402 = ssub.s32 %s27, 1
        %s403 = sand.u32 %s40, 1
        %s404 = scalar_lea.sflag [#allocation4], %s403
        %s405 = sand.u32 %s40, 1
        %s406 = smul.addr %s405, 8
        %s407 = scalar_lea.vmem [#allocation3], %s406
        // Predicated region
        $region65: #{tpu_custom_call.1} parent=63 // pred_check
          %p408 = pneg %p53
        $region66: #{tpu_custom_call.1} parent=63 // pred_check_branch
          %410 = sbr.rel (%p408) target = $region68
        $region67: #{tpu_custom_call.1} parent=63 // pred_region
          %411 = dma.done %s404, 128
        $region68: #{tpu_custom_call.1} parent=63 // pred_fallthru
          _
        // Predicated region
        $region69: #{tpu_custom_call.1} parent=63 // pred_check
          %p412 = pneg %p74
        $region70: #{tpu_custom_call.1} parent=63 // pred_check_branch
          %414 = sbr.rel (%p412) target = $region72
        $region71: #{tpu_custom_call.1} parent=63 // pred_region
          %415 = dma.done [#allocation7], 2048
        $region72: #{tpu_custom_call.1} parent=63 // pred_fallthru
          _
        // Predicated region
        $region73: #{tpu_custom_call.1} parent=63 // pred_check
          %p416 = pneg %p116
        $region74: #{tpu_custom_call.1} parent=63 // pred_check_branch
          %418 = sbr.rel (%p416) target = $region76
        $region75: #{tpu_custom_call.1} parent=63 // pred_region
          %419 = dma.done [#allocation7], 32768
        $region76: #{tpu_custom_call.1} parent=63 // pred_fallthru
          _
        // Predicated region
        $region77: #{tpu_custom_call.1} parent=63 // pred_check
          %p420 = pneg %p158
        $region78: #{tpu_custom_call.1} parent=63 // pred_check_branch
          %422 = sbr.rel (%p420) target = $region80
        $region79: #{tpu_custom_call.1} parent=63 // pred_region
          %423 = dma.done [#allocation10], 8192
        $region80: #{tpu_custom_call.1} parent=63 // pred_fallthru
          _
        // Predicated region
        $region81: #{tpu_custom_call.1} parent=63 // pred_check
          %p424 = pneg %p200
        $region82: #{tpu_custom_call.1} parent=63 // pred_check_branch
          %426 = sbr.rel (%p424) target = $region84
        $region83: #{tpu_custom_call.1} parent=63 // pred_region
          %427 = dma.done [#allocation10], 2048
        $region84: #{tpu_custom_call.1} parent=63 // pred_fallthru
          _
        %s428 = sand.u32 %s40, 1
        %s429 = scalar_lea.sflag [#allocation4], %s428
        %s430 = sand.u32 %s40, 1
        %s431 = smul.addr %s430, 8
        %s432 = scalar_lea.vmem [#allocation3], %s431
        %p433 = pneg %p53
        %p434 = pneg %p50
        %p435 = pneg %p74
        %p436 = pneg %p71
        %p437 = pneg %p95
        %p438 = pneg %p92
        %p439 = pneg %p116
        %p440 = pneg %p113
        %p441 = pneg %p137
        %p442 = pneg %p134
        %p443 = pneg %p158
        %p444 = pneg %p155
        %p445 = pneg %p179
        %p446 = pneg %p176
        %p447 = pneg %p200
        %p448 = pneg %p197
        %p449 = pneg %p221
        %p450 = pneg %p218
        %p451 = pneg %p242
        %p452 = pneg %p239
        %p453 = pneg %p263
        %p454 = pneg %p260
        %p455 = pneg %p289
        %p456 = pneg %p286
        %s457 = sand.u32 %s276, 1
        %s458 = scalar_lea.sflag [#allocation5], %s457
        %s459 = sand.u32 %s276, 1
        %s460 = scalar_lea.vmem [#allocation12], %s459
        %v462 = vld [vmem:[%s407] sm:$0xff]
        %v463 = vpack.c.bf16 %v462, %v462
        %v464 = vld [vmem:[#allocation6] sm:$0xff]
        %v465 = vld [vmem:[#allocation6 + $0x8] sm:$0xff]
        %v466 = vld [vmem:[#allocation6 + $0x10] sm:$0xff]
        %v467 = vld [vmem:[#allocation6 + $0x18] sm:$0xff]
        %v468 = vld [vmem:[#allocation6 + $0x20] sm:$0xff]
        %v469 = vld [vmem:[#allocation6 + $0x28] sm:$0xff]
        %v470 = vld [vmem:[#allocation6 + $0x30] sm:$0xff]
        %v471 = vld [vmem:[#allocation6 + $0x38] sm:$0xff]
        %v472 = vld [vmem:[#allocation6 + $0x40] sm:$0xff]
        %v473 = vld [vmem:[#allocation6 + $0x48] sm:$0xff]
        %v474 = vld [vmem:[#allocation6 + $0x50] sm:$0xff]
        %v475 = vld [vmem:[#allocation6 + $0x58] sm:$0xff]
        %v476 = vld [vmem:[#allocation6 + $0x60] sm:$0xff]
        %v477 = vld [vmem:[#allocation6 + $0x68] sm:$0xff]
        %v478 = vld [vmem:[#allocation6 + $0x70] sm:$0xff]
        %v479 = vld [vmem:[#allocation6 + $0x78] sm:$0xff]
        %v480 = vld [vmem:[%s2] sm:$0xff]
        %v482 = vlaneseq
        %v483 = vshrl.u32 %v482, 7
        %v484 = vsub.s32 0, %v483
        %v485 = vrot.slane %v480, %v484
        %v486 = vlaneseq
        %v487 = vshrl.u32 %v486, 7
        %v488 = vsub.s32 1, %v487
        %v489 = vrot.slane %v480, %v488
        %v490 = vlaneseq
        %v491 = vshrl.u32 %v490, 7
        %v492 = vsub.s32 2, %v491
        %v493 = vrot.slane %v480, %v492
        %v494 = vlaneseq
        %v495 = vshrl.u32 %v494, 7
        %v496 = vsub.s32 3, %v495
        %v497 = vrot.slane %v480, %v496
        %v498 = vlaneseq
        %v499 = vshrl.u32 %v498, 7
        %v500 = vsub.s32 4, %v499
        %v501 = vrot.slane %v480, %v500
        %v502 = vlaneseq
        %v503 = vshrl.u32 %v502, 7
        %v504 = vsub.s32 5, %v503
        %v505 = vrot.slane %v480, %v504
        %v506 = vlaneseq
        %v507 = vshrl.u32 %v506, 7
        %v508 = vsub.s32 6, %v507
        %v509 = vrot.slane %v480, %v508
        %v510 = vlaneseq
        %v511 = vshrl.u32 %v510, 7
        %v512 = vsub.s32 7, %v511
        %v513 = vrot.slane %v480, %v512
        %v538 = vunpack.c.l.b16 %v464
        %v539 = vunpack.c.h.b16 %v464
        %v540 = vunpack.c.l.b16 %v465
        %v541 = vunpack.c.h.b16 %v465
        %v542 = vunpack.c.l.b16 %v466
        %v543 = vunpack.c.h.b16 %v466
        %v544 = vunpack.c.l.b16 %v467
        %v545 = vunpack.c.h.b16 %v467
        %v546 = vunpack.c.l.b16 %v468
        %v547 = vunpack.c.h.b16 %v468
        %v548 = vunpack.c.l.b16 %v469
        %v549 = vunpack.c.h.b16 %v469
        %v550 = vunpack.c.l.b16 %v470
        %v551 = vunpack.c.h.b16 %v470
        %v552 = vunpack.c.l.b16 %v471
        %v553 = vunpack.c.h.b16 %v471
        %v554 = vunpack.c.l.b16 %v472
        %v555 = vunpack.c.h.b16 %v472
        %v556 = vunpack.c.l.b16 %v473
        %v557 = vunpack.c.h.b16 %v473
        %v558 = vunpack.c.l.b16 %v474
        %v559 = vunpack.c.h.b16 %v474
        %v560 = vunpack.c.l.b16 %v475
        %v561 = vunpack.c.h.b16 %v475
        %v562 = vunpack.c.l.b16 %v476
        %v563 = vunpack.c.h.b16 %v476
        %v564 = vunpack.c.l.b16 %v477
        %v565 = vunpack.c.h.b16 %v477
        %v566 = vunpack.c.l.b16 %v478
        %v567 = vunpack.c.h.b16 %v478
        %v568 = vunpack.c.l.b16 %v479
        %v569 = vunpack.c.h.b16 %v479
        %v570 = vpack.c.b16 %v546, %v538
        %v571 = vpack.c.b16 %v547, %v539
        %v572 = vpack.c.b16 %v548, %v540
        %v573 = vpack.c.b16 %v549, %v541
        %v574 = vpack.c.b16 %v550, %v542
        %v575 = vpack.c.b16 %v551, %v543
        %v576 = vpack.c.b16 %v552, %v544
        %v577 = vpack.c.b16 %v553, %v545
        %v578 = vpack.c.b16 %v562, %v554
        %v579 = vpack.c.b16 %v563, %v555
        %v580 = vpack.c.b16 %v564, %v556
        %v581 = vpack.c.b16 %v565, %v557
        %v582 = vpack.c.b16 %v566, %v558
        %v583 = vpack.c.b16 %v567, %v559
        %v584 = vpack.c.b16 %v568, %v560
        %v585 = vpack.c.b16 %v569, %v561
        %vm602 = vcmask 261120
        %v604 = vsel %vm602, %v463, 0
        %606 = vmatprep.subr.bf16.mxu0 %v571
        %607 = vmatpush1.bf16.msra.mxu0 %v570
        %608 = vmatprep.subr.bf16.mxu0 %v579
        %609 = vmatpush1.bf16.msra.mxu0 %v578
        %610 = vmatprep.subr.bf16.mxu0 0
        %611 = vmatpush1.bf16.msra.mxu0 0
        %612 = vmatprep.subr.bf16.mxu0 0
        %613 = vmatpush1.bf16.msra.mxu0 0
        %614 = vmatprep.subr.bf16.mxu0 0
        %615 = vmatpush1.bf16.msra.mxu0 0
        %616 = vmatprep.subr.bf16.mxu0 0
        %617 = vmatpush1.bf16.msra.mxu0 0
        %618 = vmatprep.subr.bf16.mxu0 0
        %619 = vmatpush1.bf16.msra.mxu0 0
        %620 = vmatprep.subr.bf16.mxu0 0
        %621 = vmatpush1.bf16.msra.mxu0 0
        %622 = vmatprep.subr.bf16.mxu0 0
        %623 = vmatpush1.bf16.msra.mxu0 0
        %624 = vmatprep.subr.bf16.mxu0 0
        %625 = vmatpush1.bf16.msra.mxu0 0
        %626 = vmatprep.subr.bf16.mxu0 0
        %627 = vmatpush1.bf16.msra.mxu0 0
        %628 = vmatprep.subr.bf16.mxu0 0
        %629 = vmatpush1.bf16.msra.mxu0 0
        %630 = vmatprep.subr.bf16.mxu0 0
        %631 = vmatpush1.bf16.msra.mxu0 0
        %632 = vmatprep.subr.bf16.mxu0 0
        %633 = vmatpush1.bf16.msra.mxu0 0
        %634 = vmatprep.subr.bf16.mxu0 0
        %635 = vmatpush1.bf16.msra.mxu0 0
        %636 = vmatprep.subr.bf16.mxu0 0
        %637 = vmatpush1.bf16.msra.mxu0 0
        %638 = vmatprep.mubr.bf16.mxu0 0
        %639 = vmatmul.mubr.bf16.gmra.mrb[0].mxu0 %v604
        %v640 = vpop.f32.mrb[0].mxu0
        %v641 = vadd.f32 %v485, %v640
        %v642 = vpop.f32.mrb[0].mxu0
        %v643 = vadd.f32 %v489, %v642
        %v644 = vpop.f32.mrb[0].mxu0
        %v645 = vpop.f32.mrb[0].mxu0
        %646 = vdwg.mxu0
        %647 = vmatprep.subr.bf16.mxu0 %v573
        %648 = vmatpush1.bf16.msra.mxu0 %v572
        %649 = vmatprep.subr.bf16.mxu0 %v581
        %650 = vmatpush1.bf16.msra.mxu0 %v580
        %651 = vmatprep.subr.bf16.mxu0 0
        %652 = vmatpush1.bf16.msra.mxu0 0
        %653 = vmatprep.subr.bf16.mxu0 0
        %654 = vmatpush1.bf16.msra.mxu0 0
        %655 = vmatprep.subr.bf16.mxu0 0
        %656 = vmatpush1.bf16.msra.mxu0 0
        %657 = vmatprep.subr.bf16.mxu0 0
        %658 = vmatpush1.bf16.msra.mxu0 0
        %659 = vmatprep.subr.bf16.mxu0 0
        %660 = vmatpush1.bf16.msra.mxu0 0
        %661 = vmatprep.subr.bf16.mxu0 0
        %662 = vmatpush1.bf16.msra.mxu0 0
        %663 = vmatprep.subr.bf16.mxu0 0
        %664 = vmatpush1.bf16.msra.mxu0 0
        %665 = vmatprep.subr.bf16.mxu0 0
        %666 = vmatpush1.bf16.msra.mxu0 0
        %667 = vmatprep.subr.bf16.mxu0 0
        %668 = vmatpush1.bf16.msra.mxu0 0
        %669 = vmatprep.subr.bf16.mxu0 0
        %670 = vmatpush1.bf16.msra.mxu0 0
        %671 = vmatprep.subr.bf16.mxu0 0
        %672 = vmatpush1.bf16.msra.mxu0 0
        %673 = vmatprep.subr.bf16.mxu0 0
        %674 = vmatpush1.bf16.msra.mxu0 0
        %675 = vmatprep.subr.bf16.mxu0 0
        %676 = vmatpush1.bf16.msra.mxu0 0
        %677 = vmatprep.subr.bf16.mxu0 0
        %678 = vmatpush1.bf16.msra.mxu0 0
        %679 = vmatprep.mubr.bf16.mxu0 0
        %680 = vmatmul.mubr.bf16.gmra.mrb[0].mxu0 %v604
        %v681 = vpop.f32.mrb[0].mxu0
        %v682 = vadd.f32 %v493, %v681
        %v683 = vpop.f32.mrb[0].mxu0
        %v684 = vadd.f32 %v497, %v683
        %v685 = vpop.f32.mrb[0].mxu0
        %v686 = vpop.f32.mrb[0].mxu0
        %687 = vdwg.mxu0
        %688 = vmatprep.subr.bf16.mxu0 %v575
        %689 = vmatpush1.bf16.msra.mxu0 %v574
        %690 = vmatprep.subr.bf16.mxu0 %v583
        %691 = vmatpush1.bf16.msra.mxu0 %v582
        %692 = vmatprep.subr.bf16.mxu0 0
        %693 = vmatpush1.bf16.msra.mxu0 0
        %694 = vmatprep.subr.bf16.mxu0 0
        %695 = vmatpush1.bf16.msra.mxu0 0
        %696 = vmatprep.subr.bf16.mxu0 0
        %697 = vmatpush1.bf16.msra.mxu0 0
        %698 = vmatprep.subr.bf16.mxu0 0
        %699 = vmatpush1.bf16.msra.mxu0 0
        %700 = vmatprep.subr.bf16.mxu0 0
        %701 = vmatpush1.bf16.msra.mxu0 0
        %702 = vmatprep.subr.bf16.mxu0 0
        %703 = vmatpush1.bf16.msra.mxu0 0
        %704 = vmatprep.subr.bf16.mxu0 0
        %705 = vmatpush1.bf16.msra.mxu0 0
        %706 = vmatprep.subr.bf16.mxu0 0
        %707 = vmatpush1.bf16.msra.mxu0 0
        %708 = vmatprep.subr.bf16.mxu0 0
        %709 = vmatpush1.bf16.msra.mxu0 0
        %710 = vmatprep.subr.bf16.mxu0 0
        %711 = vmatpush1.bf16.msra.mxu0 0
        %712 = vmatprep.subr.bf16.mxu0 0
        %713 = vmatpush1.bf16.msra.mxu0 0
        %714 = vmatprep.subr.bf16.mxu0 0
        %715 = vmatpush1.bf16.msra.mxu0 0
        %716 = vmatprep.subr.bf16.mxu0 0
        %717 = vmatpush1.bf16.msra.mxu0 0
        %718 = vmatprep.subr.bf16.mxu0 0
        %719 = vmatpush1.bf16.msra.mxu0 0
        %720 = vmatprep.mubr.bf16.mxu0 0
        %721 = vmatmul.mubr.bf16.gmra.mrb[0].mxu0 %v604
        %v722 = vpop.f32.mrb[0].mxu0
        %v723 = vadd.f32 %v501, %v722
        %v724 = vpop.f32.mrb[0].mxu0
        %v725 = vadd.f32 %v505, %v724
        %v726 = vpop.f32.mrb[0].mxu0
        %v727 = vpop.f32.mrb[0].mxu0
        %728 = vdwg.mxu0
        %729 = vmatprep.subr.bf16.mxu0 %v577
        %730 = vmatpush1.bf16.msra.mxu0 %v576
        %731 = vmatprep.subr.bf16.mxu0 %v585
        %732 = vmatpush1.bf16.msra.mxu0 %v584
        %733 = vmatprep.subr.bf16.mxu0 0
        %734 = vmatpush1.bf16.msra.mxu0 0
        %735 = vmatprep.subr.bf16.mxu0 0
        %736 = vmatpush1.bf16.msra.mxu0 0
        %737 = vmatprep.subr.bf16.mxu0 0
        %738 = vmatpush1.bf16.msra.mxu0 0
        %739 = vmatprep.subr.bf16.mxu0 0
        %740 = vmatpush1.bf16.msra.mxu0 0
        %741 = vmatprep.subr.bf16.mxu0 0
        %742 = vmatpush1.bf16.msra.mxu0 0
        %743 = vmatprep.subr.bf16.mxu0 0
        %744 = vmatpush1.bf16.msra.mxu0 0
        %745 = vmatprep.subr.bf16.mxu0 0
        %746 = vmatpush1.bf16.msra.mxu0 0
        %747 = vmatprep.subr.bf16.mxu0 0
        %748 = vmatpush1.bf16.msra.mxu0 0
        %749 = vmatprep.subr.bf16.mxu0 0
        %750 = vmatpush1.bf16.msra.mxu0 0
        %751 = vmatprep.subr.bf16.mxu0 0
        %752 = vmatpush1.bf16.msra.mxu0 0
        %753 = vmatprep.subr.bf16.mxu0 0
        %754 = vmatpush1.bf16.msra.mxu0 0
        %755 = vmatprep.subr.bf16.mxu0 0
        %756 = vmatpush1.bf16.msra.mxu0 0
        %757 = vmatprep.subr.bf16.mxu0 0
        %758 = vmatpush1.bf16.msra.mxu0 0
        %759 = vmatprep.subr.bf16.mxu0 0
        %760 = vmatpush1.bf16.msra.mxu0 0
        %761 = vmatprep.mubr.bf16.mxu0 0
        %762 = vmatmul.mubr.bf16.gmra.mrb[0].mxu0 %v604
        %v763 = vpop.f32.mrb[0].mxu0
        %v764 = vadd.f32 %v509, %v763
        %v765 = vpop.f32.mrb[0].mxu0
        %v766 = vadd.f32 %v513, %v765
        %v767 = vpop.f32.mrb[0].mxu0
        %v768 = vpop.f32.mrb[0].mxu0
        %769 = vdwg.mxu0
        %v770 = vmax.f32 %v641, 0.0
        %v771 = vmax.f32 %v643, 0.0
        %v772 = vmax.f32 %v682, 0.0
        %v773 = vmax.f32 %v684, 0.0
        %v774 = vmax.f32 %v723, 0.0
        %v775 = vmax.f32 %v725, 0.0
        %v776 = vmax.f32 %v764, 0.0
        %v777 = vmax.f32 %v766, 0.0
        %v778 = vpack.c.bf16 %v770, %v770
        %v779 = vpack.c.bf16 %v771, %v771
        %v780 = vpack.c.bf16 %v772, %v772
        %v781 = vpack.c.bf16 %v773, %v773
        %v782 = vpack.c.bf16 %v774, %v774
        %v783 = vpack.c.bf16 %v775, %v775
        %v784 = vpack.c.bf16 %v776, %v776
        %v785 = vpack.c.bf16 %v777, %v777
        %v786 = vld [vmem:[#allocation8] sm:$0xff]
        %v787 = vld [vmem:[#allocation8 + $0x8] sm:$0xff]
        %v788 = vld [vmem:[#allocation8 + $0x10] sm:$0xff]
        %v789 = vld [vmem:[#allocation8 + $0x18] sm:$0xff]
        %v790 = vld [vmem:[#allocation8 + $0x20] sm:$0xff]
        %v791 = vld [vmem:[#allocation8 + $0x28] sm:$0xff]
        %v792 = vld [vmem:[#allocation8 + $0x30] sm:$0xff]
        %v793 = vld [vmem:[#allocation8 + $0x38] sm:$0xff]
        %v794 = vld [vmem:[#allocation8 + $0x40] sm:$0xff]
        %v795 = vld [vmem:[#allocation8 + $0x48] sm:$0xff]
        %v796 = vld [vmem:[#allocation8 + $0x50] sm:$0xff]
        %v797 = vld [vmem:[#allocation8 + $0x58] sm:$0xff]
        %v798 = vld [vmem:[#allocation8 + $0x60] sm:$0xff]
        %v799 = vld [vmem:[#allocation8 + $0x68] sm:$0xff]
        %v800 = vld [vmem:[#allocation8 + $0x70] sm:$0xff]
        %v801 = vld [vmem:[#allocation8 + $0x78] sm:$0xff]
        %v802 = vld [vmem:[#allocation8 + $0x80] sm:$0xff]
        %v803 = vld [vmem:[#allocation8 + $0x88] sm:$0xff]
        %v804 = vld [vmem:[#allocation8 + $0x90] sm:$0xff]
        %v805 = vld [vmem:[#allocation8 + $0x98] sm:$0xff]
        %v806 = vld [vmem:[#allocation8 + $0xa0] sm:$0xff]
        %v807 = vld [vmem:[#allocation8 + $0xa8] sm:$0xff]
        %v808 = vld [vmem:[#allocation8 + $0xb0] sm:$0xff]
        %v809 = vld [vmem:[#allocation8 + $0xb8] sm:$0xff]
        %v810 = vld [vmem:[#allocation8 + $0xc0] sm:$0xff]
        %v811 = vld [vmem:[#allocation8 + $0xc8] sm:$0xff]
        %v812 = vld [vmem:[#allocation8 + $0xd0] sm:$0xff]
        %v813 = vld [vmem:[#allocation8 + $0xd8] sm:$0xff]
        %v814 = vld [vmem:[#allocation8 + $0xe0] sm:$0xff]
        %v815 = vld [vmem:[#allocation8 + $0xe8] sm:$0xff]
        %v816 = vld [vmem:[#allocation8 + $0xf0] sm:$0xff]
        %v817 = vld [vmem:[#allocation8 + $0xf8] sm:$0xff]
        %v818 = vld [vmem:[#allocation8 + $0x100] sm:$0xff]
        %v819 = vld [vmem:[#allocation8 + $0x108] sm:$0xff]
        %v820 = vld [vmem:[#allocation8 + $0x110] sm:$0xff]
        %v821 = vld [vmem:[#allocation8 + $0x118] sm:$0xff]
        %v822 = vld [vmem:[#allocation8 + $0x120] sm:$0xff]
        %v823 = vld [vmem:[#allocation8 + $0x128] sm:$0xff]
        %v824 = vld [vmem:[#allocation8 + $0x130] sm:$0xff]
        %v825 = vld [vmem:[#allocation8 + $0x138] sm:$0xff]
        %v826 = vld [vmem:[#allocation8 + $0x140] sm:$0xff]
        %v827 = vld [vmem:[#allocation8 + $0x148] sm:$0xff]
        %v828 = vld [vmem:[#allocation8 + $0x150] sm:$0xff]
        %v829 = vld [vmem:[#allocation8 + $0x158] sm:$0xff]
        %v830 = vld [vmem:[#allocation8 + $0x160] sm:$0xff]
        %v831 = vld [vmem:[#allocation8 + $0x168] sm:$0xff]
        %v832 = vld [vmem:[#allocation8 + $0x170] sm:$0xff]
        %v833 = vld [vmem:[#allocation8 + $0x178] sm:$0xff]
        %v834 = vld [vmem:[#allocation8 + $0x180] sm:$0xff]
        %v835 = vld [vmem:[#allocation8 + $0x188] sm:$0xff]
        %v836 = vld [vmem:[#allocation8 + $0x190] sm:$0xff]
        %v837 = vld [vmem:[#allocation8 + $0x198] sm:$0xff]
        %v838 = vld [vmem:[#allocation8 + $0x1a0] sm:$0xff]
        %v839 = vld [vmem:[#allocation8 + $0x1a8] sm:$0xff]
        %v840 = vld [vmem:[#allocation8 + $0x1b0] sm:$0xff]
        %v841 = vld [vmem:[#allocation8 + $0x1b8] sm:$0xff]
        %v842 = vld [vmem:[#allocation8 + $0x1c0] sm:$0xff]
        %v843 = vld [vmem:[#allocation8 + $0x1c8] sm:$0xff]
        %v844 = vld [vmem:[#allocation8 + $0x1d0] sm:$0xff]
        %v845 = vld [vmem:[#allocation8 + $0x1d8] sm:$0xff]
        %v846 = vld [vmem:[#allocation8 + $0x1e0] sm:$0xff]
        %v847 = vld [vmem:[#allocation8 + $0x1e8] sm:$0xff]
        %v848 = vld [vmem:[#allocation8 + $0x1f0] sm:$0xff]
        %v849 = vld [vmem:[#allocation8 + $0x1f8] sm:$0xff]
        %v850 = vld [vmem:[#allocation8 + $0x200] sm:$0xff]
        %v851 = vld [vmem:[#allocation8 + $0x208] sm:$0xff]
        %v852 = vld [vmem:[#allocation8 + $0x210] sm:$0xff]
        %v853 = vld [vmem:[#allocation8 + $0x218] sm:$0xff]
        %v854 = vld [vmem:[#allocation8 + $0x220] sm:$0xff]
        %v855 = vld [vmem:[#allocation8 + $0x228] sm:$0xff]
        %v856 = vld [vmem:[#allocation8 + $0x230] sm:$0xff]
        %v857 = vld [vmem:[#allocation8 + $0x238] sm:$0xff]
        %v858 = vld [vmem:[#allocation8 + $0x240] sm:$0xff]
        %v859 = vld [vmem:[#allocation8 + $0x248] sm:$0xff]
        %v860 = vld [vmem:[#allocation8 + $0x250] sm:$0xff]
        %v861 = vld [vmem:[#allocation8 + $0x258] sm:$0xff]
        %v862 = vld [vmem:[#allocation8 + $0x260] sm:$0xff]
        %v863 = vld [vmem:[#allocation8 + $0x268] sm:$0xff]
        %v864 = vld [vmem:[#allocation8 + $0x270] sm:$0xff]
        %v865 = vld [vmem:[#allocation8 + $0x278] sm:$0xff]
        %v866 = vld [vmem:[#allocation8 + $0x280] sm:$0xff]
        %v867 = vld [vmem:[#allocation8 + $0x288] sm:$0xff]
        %v868 = vld [vmem:[#allocation8 + $0x290] sm:$0xff]
        %v869 = vld [vmem:[#allocation8 + $0x298] sm:$0xff]
        %v870 = vld [vmem:[#allocation8 + $0x2a0] sm:$0xff]
        %v871 = vld [vmem:[#allocation8 + $0x2a8] sm:$0xff]
        %v872 = vld [vmem:[#allocation8 + $0x2b0] sm:$0xff]
        %v873 = vld [vmem:[#allocation8 + $0x2b8] sm:$0xff]
        %v874 = vld [vmem:[#allocation8 + $0x2c0] sm:$0xff]
        %v875 = vld [vmem:[#allocation8 + $0x2c8] sm:$0xff]
        %v876 = vld [vmem:[#allocation8 + $0x2d0] sm:$0xff]
        %v877 = vld [vmem:[#allocation8 + $0x2d8] sm:$0xff]
        %v878 = vld [vmem:[#allocation8 + $0x2e0] sm:$0xff]
        %v879 = vld [vmem:[#allocation8 + $0x2e8] sm:$0xff]
        %v880 = vld [vmem:[#allocation8 + $0x2f0] sm:$0xff]
        %v881 = vld [vmem:[#allocation8 + $0x2f8] sm:$0xff]
        %v882 = vld [vmem:[#allocation8 + $0x300] sm:$0xff]
        %v883 = vld [vmem:[#allocation8 + $0x308] sm:$0xff]
        %v884 = vld [vmem:[#allocation8 + $0x310] sm:$0xff]
        %v885 = vld [vmem:[#allocation8 + $0x318] sm:$0xff]
        %v886 = vld [vmem:[#allocation8 + $0x320] sm:$0xff]
        %v887 = vld [vmem:[#allocation8 + $0x328] sm:$0xff]
        %v888 = vld [vmem:[#allocation8 + $0x330] sm:$0xff]
        %v889 = vld [vmem:[#allocation8 + $0x338] sm:$0xff]
        %v890 = vld [vmem:[#allocation8 + $0x340] sm:$0xff]
        %v891 = vld [vmem:[#allocation8 + $0x348] sm:$0xff]
        %v892 = vld [vmem:[#allocation8 + $0x350] sm:$0xff]
        %v893 = vld [vmem:[#allocation8 + $0x358] sm:$0xff]
        %v894 = vld [vmem:[#allocation8 + $0x360] sm:$0xff]
        %v895 = vld [vmem:[#allocation8 + $0x368] sm:$0xff]
        %v896 = vld [vmem:[#allocation8 + $0x370] sm:$0xff]
        %v897 = vld [vmem:[#allocation8 + $0x378] sm:$0xff]
        %v898 = vld [vmem:[#allocation8 + $0x380] sm:$0xff]
        %v899 = vld [vmem:[#allocation8 + $0x388] sm:$0xff]
        %v900 = vld [vmem:[#allocation8 + $0x390] sm:$0xff]
        %v901 = vld [vmem:[#allocation8 + $0x398] sm:$0xff]
        %v902 = vld [vmem:[#allocation8 + $0x3a0] sm:$0xff]
        %v903 = vld [vmem:[#allocation8 + $0x3a8] sm:$0xff]
        %v904 = vld [vmem:[#allocation8 + $0x3b0] sm:$0xff]
        %v905 = vld [vmem:[#allocation8 + $0x3b8] sm:$0xff]
        %v906 = vld [vmem:[#allocation8 + $0x3c0] sm:$0xff]
        %v907 = vld [vmem:[#allocation8 + $0x3c8] sm:$0xff]
        %v908 = vld [vmem:[#allocation8 + $0x3d0] sm:$0xff]
        %v909 = vld [vmem:[#allocation8 + $0x3d8] sm:$0xff]
        %v910 = vld [vmem:[#allocation8 + $0x3e0] sm:$0xff]
        %v911 = vld [vmem:[#allocation8 + $0x3e8] sm:$0xff]
        %v912 = vld [vmem:[#allocation8 + $0x3f0] sm:$0xff]
        %v913 = vld [vmem:[#allocation8 + $0x3f8] sm:$0xff]
        %v914 = vld [vmem:[#allocation8 + $0x400] sm:$0xff]
        %v915 = vld [vmem:[#allocation8 + $0x408] sm:$0xff]
        %v916 = vld [vmem:[#allocation8 + $0x410] sm:$0xff]
        %v917 = vld [vmem:[#allocation8 + $0x418] sm:$0xff]
        %v918 = vld [vmem:[#allocation8 + $0x420] sm:$0xff]
        %v919 = vld [vmem:[#allocation8 + $0x428] sm:$0xff]
        %v920 = vld [vmem:[#allocation8 + $0x430] sm:$0xff]
        %v921 = vld [vmem:[#allocation8 + $0x438] sm:$0xff]
        %v922 = vld [vmem:[#allocation8 + $0x440] sm:$0xff]
        %v923 = vld [vmem:[#allocation8 + $0x448] sm:$0xff]
        %v924 = vld [vmem:[#allocation8 + $0x450] sm:$0xff]
        %v925 = vld [vmem:[#allocation8 + $0x458] sm:$0xff]
        %v926 = vld [vmem:[#allocation8 + $0x460] sm:$0xff]
        %v927 = vld [vmem:[#allocation8 + $0x468] sm:$0xff]
        %v928 = vld [vmem:[#allocation8 + $0x470] sm:$0xff]
        %v929 = vld [vmem:[#allocation8 + $0x478] sm:$0xff]
        %v930 = vld [vmem:[#allocation8 + $0x480] sm:$0xff]
        %v931 = vld [vmem:[#allocation8 + $0x488] sm:$0xff]
        %v932 = vld [vmem:[#allocation8 + $0x490] sm:$0xff]
        %v933 = vld [vmem:[#allocation8 + $0x498] sm:$0xff]
        %v934 = vld [vmem:[#allocation8 + $0x4a0] sm:$0xff]
        %v935 = vld [vmem:[#allocation8 + $0x4a8] sm:$0xff]
        %v936 = vld [vmem:[#allocation8 + $0x4b0] sm:$0xff]
        %v937 = vld [vmem:[#allocation8 + $0x4b8] sm:$0xff]
        %v938 = vld [vmem:[#allocation8 + $0x4c0] sm:$0xff]
        %v939 = vld [vmem:[#allocation8 + $0x4c8] sm:$0xff]
        %v940 = vld [vmem:[#allocation8 + $0x4d0] sm:$0xff]
        %v941 = vld [vmem:[#allocation8 + $0x4d8] sm:$0xff]
        %v942 = vld [vmem:[#allocation8 + $0x4e0] sm:$0xff]
        %v943 = vld [vmem:[#allocation8 + $0x4e8] sm:$0xff]
        %v944 = vld [vmem:[#allocation8 + $0x4f0] sm:$0xff]
        %v945 = vld [vmem:[#allocation8 + $0x4f8] sm:$0xff]
        %v946 = vld [vmem:[#allocation8 + $0x500] sm:$0xff]
        %v947 = vld [vmem:[#allocation8 + $0x508] sm:$0xff]
        %v948 = vld [vmem:[#allocation8 + $0x510] sm:$0xff]
        %v949 = vld [vmem:[#allocation8 + $0x518] sm:$0xff]
        %v950 = vld [vmem:[#allocation8 + $0x520] sm:$0xff]
        %v951 = vld [vmem:[#allocation8 + $0x528] sm:$0xff]
        %v952 = vld [vmem:[#allocation8 + $0x530] sm:$0xff]
        %v953 = vld [vmem:[#allocation8 + $0x538] sm:$0xff]
        %v954 = vld [vmem:[#allocation8 + $0x540] sm:$0xff]
        %v955 = vld [vmem:[#allocation8 + $0x548] sm:$0xff]
        %v956 = vld [vmem:[#allocation8 + $0x550] sm:$0xff]
        %v957 = vld [vmem:[#allocation8 + $0x558] sm:$0xff]
        %v958 = vld [vmem:[#allocation8 + $0x560] sm:$0xff]
        %v959 = vld [vmem:[#allocation8 + $0x568] sm:$0xff]
        %v960 = vld [vmem:[#allocation8 + $0x570] sm:$0xff]
        %v961 = vld [vmem:[#allocation8 + $0x578] sm:$0xff]
        %v962 = vld [vmem:[#allocation8 + $0x580] sm:$0xff]
        %v963 = vld [vmem:[#allocation8 + $0x588] sm:$0xff]
        %v964 = vld [vmem:[#allocation8 + $0x590] sm:$0xff]
        %v965 = vld [vmem:[#allocation8 + $0x598] sm:$0xff]
        %v966 = vld [vmem:[#allocation8 + $0x5a0] sm:$0xff]
        %v967 = vld [vmem:[#allocation8 + $0x5a8] sm:$0xff]
        %v968 = vld [vmem:[#allocation8 + $0x5b0] sm:$0xff]
        %v969 = vld [vmem:[#allocation8 + $0x5b8] sm:$0xff]
        %v970 = vld [vmem:[#allocation8 + $0x5c0] sm:$0xff]
        %v971 = vld [vmem:[#allocation8 + $0x5c8] sm:$0xff]
        %v972 = vld [vmem:[#allocation8 + $0x5d0] sm:$0xff]
        %v973 = vld [vmem:[#allocation8 + $0x5d8] sm:$0xff]
        %v974 = vld [vmem:[#allocation8 + $0x5e0] sm:$0xff]
        %v975 = vld [vmem:[#allocation8 + $0x5e8] sm:$0xff]
        %v976 = vld [vmem:[#allocation8 + $0x5f0] sm:$0xff]
        %v977 = vld [vmem:[#allocation8 + $0x5f8] sm:$0xff]
        %v978 = vld [vmem:[#allocation8 + $0x600] sm:$0xff]
        %v979 = vld [vmem:[#allocation8 + $0x608] sm:$0xff]
        %v980 = vld [vmem:[#allocation8 + $0x610] sm:$0xff]
        %v981 = vld [vmem:[#allocation8 + $0x618] sm:$0xff]
        %v982 = vld [vmem:[#allocation8 + $0x620] sm:$0xff]
        %v983 = vld [vmem:[#allocation8 + $0x628] sm:$0xff]
        %v984 = vld [vmem:[#allocation8 + $0x630] sm:$0xff]
        %v985 = vld [vmem:[#allocation8 + $0x638] sm:$0xff]
        %v986 = vld [vmem:[#allocation8 + $0x640] sm:$0xff]
        %v987 = vld [vmem:[#allocation8 + $0x648] sm:$0xff]
        %v988 = vld [vmem:[#allocation8 + $0x650] sm:$0xff]
        %v989 = vld [vmem:[#allocation8 + $0x658] sm:$0xff]
        %v990 = vld [vmem:[#allocation8 + $0x660] sm:$0xff]
        %v991 = vld [vmem:[#allocation8 + $0x668] sm:$0xff]
        %v992 = vld [vmem:[#allocation8 + $0x670] sm:$0xff]
        %v993 = vld [vmem:[#allocation8 + $0x678] sm:$0xff]
        %v994 = vld [vmem:[#allocation8 + $0x680] sm:$0xff]
        %v995 = vld [vmem:[#allocation8 + $0x688] sm:$0xff]
        %v996 = vld [vmem:[#allocation8 + $0x690] sm:$0xff]
        %v997 = vld [vmem:[#allocation8 + $0x698] sm:$0xff]
        %v998 = vld [vmem:[#allocation8 + $0x6a0] sm:$0xff]
        %v999 = vld [vmem:[#allocation8 + $0x6a8] sm:$0xff]
        %v1000 = vld [vmem:[#allocation8 + $0x6b0] sm:$0xff]
        %v1001 = vld [vmem:[#allocation8 + $0x6b8] sm:$0xff]
        %v1002 = vld [vmem:[#allocation8 + $0x6c0] sm:$0xff]
        %v1003 = vld [vmem:[#allocation8 + $0x6c8] sm:$0xff]
        %v1004 = vld [vmem:[#allocation8 + $0x6d0] sm:$0xff]
        %v1005 = vld [vmem:[#allocation8 + $0x6d8] sm:$0xff]
        %v1006 = vld [vmem:[#allocation8 + $0x6e0] sm:$0xff]
        %v1007 = vld [vmem:[#allocation8 + $0x6e8] sm:$0xff]
        %v1008 = vld [vmem:[#allocation8 + $0x6f0] sm:$0xff]
        %v1009 = vld [vmem:[#allocation8 + $0x6f8] sm:$0xff]
        %v1010 = vld [vmem:[#allocation8 + $0x700] sm:$0xff]
        %v1011 = vld [vmem:[#allocation8 + $0x708] sm:$0xff]
        %v1012 = vld [vmem:[#allocation8 + $0x710] sm:$0xff]
        %v1013 = vld [vmem:[#allocation8 + $0x718] sm:$0xff]
        %v1014 = vld [vmem:[#allocation8 + $0x720] sm:$0xff]
        %v1015 = vld [vmem:[#allocation8 + $0x728] sm:$0xff]
        %v1016 = vld [vmem:[#allocation8 + $0x730] sm:$0xff]
        %v1017 = vld [vmem:[#allocation8 + $0x738] sm:$0xff]
        %v1018 = vld [vmem:[#allocation8 + $0x740] sm:$0xff]
        %v1019 = vld [vmem:[#allocation8 + $0x748] sm:$0xff]
        %v1020 = vld [vmem:[#allocation8 + $0x750] sm:$0xff]
        %v1021 = vld [vmem:[#allocation8 + $0x758] sm:$0xff]
        %v1022 = vld [vmem:[#allocation8 + $0x760] sm:$0xff]
        %v1023 = vld [vmem:[#allocation8 + $0x768] sm:$0xff]
        %v1024 = vld [vmem:[#allocation8 + $0x770] sm:$0xff]
        %v1025 = vld [vmem:[#allocation8 + $0x778] sm:$0xff]
        %v1026 = vld [vmem:[#allocation8 + $0x780] sm:$0xff]
        %v1027 = vld [vmem:[#allocation8 + $0x788] sm:$0xff]
        %v1028 = vld [vmem:[#allocation8 + $0x790] sm:$0xff]
        %v1029 = vld [vmem:[#allocation8 + $0x798] sm:$0xff]
        %v1030 = vld [vmem:[#allocation8 + $0x7a0] sm:$0xff]
        %v1031 = vld [vmem:[#allocation8 + $0x7a8] sm:$0xff]
        %v1032 = vld [vmem:[#allocation8 + $0x7b0] sm:$0xff]
        %v1033 = vld [vmem:[#allocation8 + $0x7b8] sm:$0xff]
        %v1034 = vld [vmem:[#allocation8 + $0x7c0] sm:$0xff]
        %v1035 = vld [vmem:[#allocation8 + $0x7c8] sm:$0xff]
        %v1036 = vld [vmem:[#allocation8 + $0x7d0] sm:$0xff]
        %v1037 = vld [vmem:[#allocation8 + $0x7d8] sm:$0xff]
        %v1038 = vld [vmem:[#allocation8 + $0x7e0] sm:$0xff]
        %v1039 = vld [vmem:[#allocation8 + $0x7e8] sm:$0xff]
        %v1040 = vld [vmem:[#allocation8 + $0x7f0] sm:$0xff]
        %v1041 = vld [vmem:[#allocation8 + $0x7f8] sm:$0xff]
        %v1042 = vld [vmem:[%s4] sm:$0xf]
        %v1044 = vlaneseq
        %v1045 = vshrl.u32 %v1044, 7
        %v1046 = vsub.s32 0, %v1045
        %v1047 = vrot.slane %v1042, %v1046
        %v1048 = vlaneseq
        %v1049 = vshrl.u32 %v1048, 7
        %v1050 = vsub.s32 1, %v1049
        %v1051 = vrot.slane %v1042, %v1050
        %v1052 = vlaneseq
        %v1053 = vshrl.u32 %v1052, 7
        %v1054 = vsub.s32 2, %v1053
        %v1055 = vrot.slane %v1042, %v1054
        %v1056 = vlaneseq
        %v1057 = vshrl.u32 %v1056, 7
        %v1058 = vsub.s32 3, %v1057
        %v1059 = vrot.slane %v1042, %v1058
        %v1320 = vunpack.c.l.b16 %v786
        %v1321 = vunpack.c.h.b16 %v786
        %v1322 = vunpack.c.l.b16 %v787
        %v1323 = vunpack.c.h.b16 %v787
        %v1324 = vunpack.c.l.b16 %v788
        %v1325 = vunpack.c.h.b16 %v788
        %v1326 = vunpack.c.l.b16 %v789
        %v1327 = vunpack.c.h.b16 %v789
        %v1328 = vunpack.c.l.b16 %v790
        %v1329 = vunpack.c.h.b16 %v790
        %v1330 = vunpack.c.l.b16 %v791
        %v1331 = vunpack.c.h.b16 %v791
        %v1332 = vunpack.c.l.b16 %v792
        %v1333 = vunpack.c.h.b16 %v792
        %v1334 = vunpack.c.l.b16 %v793
        %v1335 = vunpack.c.h.b16 %v793
        %v1336 = vunpack.c.l.b16 %v794
        %v1337 = vunpack.c.h.b16 %v794
        %v1338 = vunpack.c.l.b16 %v795
        %v1339 = vunpack.c.h.b16 %v795
        %v1340 = vunpack.c.l.b16 %v796
        %v1341 = vunpack.c.h.b16 %v796
        %v1342 = vunpack.c.l.b16 %v797
        %v1343 = vunpack.c.h.b16 %v797
        %v1344 = vunpack.c.l.b16 %v798
        %v1345 = vunpack.c.h.b16 %v798
        %v1346 = vunpack.c.l.b16 %v799
        %v1347 = vunpack.c.h.b16 %v799
        %v1348 = vunpack.c.l.b16 %v800
        %v1349 = vunpack.c.h.b16 %v800
        %v1350 = vunpack.c.l.b16 %v801
        %v1351 = vunpack.c.h.b16 %v801
        %v1352 = vunpack.c.l.b16 %v802
        %v1353 = vunpack.c.h.b16 %v802
        %v1354 = vunpack.c.l.b16 %v803
        %v1355 = vunpack.c.h.b16 %v803
        %v1356 = vunpack.c.l.b16 %v804
        %v1357 = vunpack.c.h.b16 %v804
        %v1358 = vunpack.c.l.b16 %v805
        %v1359 = vunpack.c.h.b16 %v805
        %v1360 = vunpack.c.l.b16 %v806
        %v1361 = vunpack.c.h.b16 %v806
        %v1362 = vunpack.c.l.b16 %v807
        %v1363 = vunpack.c.h.b16 %v807
        %v1364 = vunpack.c.l.b16 %v808
        %v1365 = vunpack.c.h.b16 %v808
        %v1366 = vunpack.c.l.b16 %v809
        %v1367 = vunpack.c.h.b16 %v809
        %v1368 = vunpack.c.l.b16 %v810
        %v1369 = vunpack.c.h.b16 %v810
        %v1370 = vunpack.c.l.b16 %v811
        %v1371 = vunpack.c.h.b16 %v811
        %v1372 = vunpack.c.l.b16 %v812
        %v1373 = vunpack.c.h.b16 %v812
        %v1374 = vunpack.c.l.b16 %v813
        %v1375 = vunpack.c.h.b16 %v813
        %v1376 = vunpack.c.l.b16 %v814
        %v1377 = vunpack.c.h.b16 %v814
        %v1378 = vunpack.c.l.b16 %v815
        %v1379 = vunpack.c.h.b16 %v815
        %v1380 = vunpack.c.l.b16 %v816
        %v1381 = vunpack.c.h.b16 %v816
        %v1382 = vunpack.c.l.b16 %v817
        %v1383 = vunpack.c.h.b16 %v817
        %v1384 = vunpack.c.l.b16 %v818
        %v1385 = vunpack.c.h.b16 %v818
        %v1386 = vunpack.c.l.b16 %v819
        %v1387 = vunpack.c.h.b16 %v819
        %v1388 = vunpack.c.l.b16 %v820
        %v1389 = vunpack.c.h.b16 %v820
        %v1390 = vunpack.c.l.b16 %v821
        %v1391 = vunpack.c.h.b16 %v821
        %v1392 = vunpack.c.l.b16 %v822
        %v1393 = vunpack.c.h.b16 %v822
        %v1394 = vunpack.c.l.b16 %v823
        %v1395 = vunpack.c.h.b16 %v823
        %v1396 = vunpack.c.l.b16 %v824
        %v1397 = vunpack.c.h.b16 %v824
        %v1398 = vunpack.c.l.b16 %v825
        %v1399 = vunpack.c.h.b16 %v825
        %v1400 = vunpack.c.l.b16 %v826
        %v1401 = vunpack.c.h.b16 %v826
        %v1402 = vunpack.c.l.b16 %v827
        %v1403 = vunpack.c.h.b16 %v827
        %v1404 = vunpack.c.l.b16 %v828
        %v1405 = vunpack.c.h.b16 %v828
        %v1406 = vunpack.c.l.b16 %v829
        %v1407 = vunpack.c.h.b16 %v829
        %v1408 = vunpack.c.l.b16 %v830
        %v1409 = vunpack.c.h.b16 %v830
        %v1410 = vunpack.c.l.b16 %v831
        %v1411 = vunpack.c.h.b16 %v831
        %v1412 = vunpack.c.l.b16 %v832
        %v1413 = vunpack.c.h.b16 %v832
        %v1414 = vunpack.c.l.b16 %v833
        %v1415 = vunpack.c.h.b16 %v833
        %v1416 = vunpack.c.l.b16 %v834
        %v1417 = vunpack.c.h.b16 %v834
        %v1418 = vunpack.c.l.b16 %v835
        %v1419 = vunpack.c.h.b16 %v835
        %v1420 = vunpack.c.l.b16 %v836
        %v1421 = vunpack.c.h.b16 %v836
        %v1422 = vunpack.c.l.b16 %v837
        %v1423 = vunpack.c.h.b16 %v837
        %v1424 = vunpack.c.l.b16 %v838
        %v1425 = vunpack.c.h.b16 %v838
        %v1426 = vunpack.c.l.b16 %v839
        %v1427 = vunpack.c.h.b16 %v839
        %v1428 = vunpack.c.l.b16 %v840
        %v1429 = vunpack.c.h.b16 %v840
        %v1430 = vunpack.c.l.b16 %v841
        %v1431 = vunpack.c.h.b16 %v841
        %v1432 = vunpack.c.l.b16 %v842
        %v1433 = vunpack.c.h.b16 %v842
        %v1434 = vunpack.c.l.b16 %v843
        %v1435 = vunpack.c.h.b16 %v843
        %v1436 = vunpack.c.l.b16 %v844
        %v1437 = vunpack.c.h.b16 %v844
        %v1438 = vunpack.c.l.b16 %v845
        %v1439 = vunpack.c.h.b16 %v845
        %v1440 = vunpack.c.l.b16 %v846
        %v1441 = vunpack.c.h.b16 %v846
        %v1442 = vunpack.c.l.b16 %v847
        %v1443 = vunpack.c.h.b16 %v847
        %v1444 = vunpack.c.l.b16 %v848
        %v1445 = vunpack.c.h.b16 %v848
        %v1446 = vunpack.c.l.b16 %v849
        %v1447 = vunpack.c.h.b16 %v849
        %v1448 = vunpack.c.l.b16 %v850
        %v1449 = vunpack.c.h.b16 %v850
        %v1450 = vunpack.c.l.b16 %v851
        %v1451 = vunpack.c.h.b16 %v851
        %v1452 = vunpack.c.l.b16 %v852
        %v1453 = vunpack.c.h.b16 %v852
        %v1454 = vunpack.c.l.b16 %v853
        %v1455 = vunpack.c.h.b16 %v853
        %v1456 = vunpack.c.l.b16 %v854
        %v1457 = vunpack.c.h.b16 %v854
        %v1458 = vunpack.c.l.b16 %v855
        %v1459 = vunpack.c.h.b16 %v855
        %v1460 = vunpack.c.l.b16 %v856
        %v1461 = vunpack.c.h.b16 %v856
        %v1462 = vunpack.c.l.b16 %v857
        %v1463 = vunpack.c.h.b16 %v857
        %v1464 = vunpack.c.l.b16 %v858
        %v1465 = vunpack.c.h.b16 %v858
        %v1466 = vunpack.c.l.b16 %v859
        %v1467 = vunpack.c.h.b16 %v859
        %v1468 = vunpack.c.l.b16 %v860
        %v1469 = vunpack.c.h.b16 %v860
        %v1470 = vunpack.c.l.b16 %v861
        %v1471 = vunpack.c.h.b16 %v861
        %v1472 = vunpack.c.l.b16 %v862
        %v1473 = vunpack.c.h.b16 %v862
        %v1474 = vunpack.c.l.b16 %v863
        %v1475 = vunpack.c.h.b16 %v863
        %v1476 = vunpack.c.l.b16 %v864
        %v1477 = vunpack.c.h.b16 %v864
        %v1478 = vunpack.c.l.b16 %v865
        %v1479 = vunpack.c.h.b16 %v865
        %v1480 = vunpack.c.l.b16 %v866
        %v1481 = vunpack.c.h.b16 %v866
        %v1482 = vunpack.c.l.b16 %v867
        %v1483 = vunpack.c.h.b16 %v867
        %v1484 = vunpack.c.l.b16 %v868
        %v1485 = vunpack.c.h.b16 %v868
        %v1486 = vunpack.c.l.b16 %v869
        %v1487 = vunpack.c.h.b16 %v869
        %v1488 = vunpack.c.l.b16 %v870
        %v1489 = vunpack.c.h.b16 %v870
        %v1490 = vunpack.c.l.b16 %v871
        %v1491 = vunpack.c.h.b16 %v871
        %v1492 = vunpack.c.l.b16 %v872
        %v1493 = vunpack.c.h.b16 %v872
        %v1494 = vunpack.c.l.b16 %v873
        %v1495 = vunpack.c.h.b16 %v873
        %v1496 = vunpack.c.l.b16 %v874
        %v1497 = vunpack.c.h.b16 %v874
        %v1498 = vunpack.c.l.b16 %v875
        %v1499 = vunpack.c.h.b16 %v875
        %v1500 = vunpack.c.l.b16 %v876
        %v1501 = vunpack.c.h.b16 %v876
        %v1502 = vunpack.c.l.b16 %v877
        %v1503 = vunpack.c.h.b16 %v877
        %v1504 = vunpack.c.l.b16 %v878
        %v1505 = vunpack.c.h.b16 %v878
        %v1506 = vunpack.c.l.b16 %v879
        %v1507 = vunpack.c.h.b16 %v879
        %v1508 = vunpack.c.l.b16 %v880
        %v1509 = vunpack.c.h.b16 %v880
        %v1510 = vunpack.c.l.b16 %v881
        %v1511 = vunpack.c.h.b16 %v881
        %v1512 = vunpack.c.l.b16 %v882
        %v1513 = vunpack.c.h.b16 %v882
        %v1514 = vunpack.c.l.b16 %v883
        %v1515 = vunpack.c.h.b16 %v883
        %v1516 = vunpack.c.l.b16 %v884
        %v1517 = vunpack.c.h.b16 %v884
        %v1518 = vunpack.c.l.b16 %v885
        %v1519 = vunpack.c.h.b16 %v885
        %v1520 = vunpack.c.l.b16 %v886
        %v1521 = vunpack.c.h.b16 %v886
        %v1522 = vunpack.c.l.b16 %v887
        %v1523 = vunpack.c.h.b16 %v887
        %v1524 = vunpack.c.l.b16 %v888
        %v1525 = vunpack.c.h.b16 %v888
        %v1526 = vunpack.c.l.b16 %v889
        %v1527 = vunpack.c.h.b16 %v889
        %v1528 = vunpack.c.l.b16 %v890
        %v1529 = vunpack.c.h.b16 %v890
        %v1530 = vunpack.c.l.b16 %v891
        %v1531 = vunpack.c.h.b16 %v891
        %v1532 = vunpack.c.l.b16 %v892
        %v1533 = vunpack.c.h.b16 %v892
        %v1534 = vunpack.c.l.b16 %v893
        %v1535 = vunpack.c.h.b16 %v893
        %v1536 = vunpack.c.l.b16 %v894
        %v1537 = vunpack.c.h.b16 %v894
        %v1538 = vunpack.c.l.b16 %v895
        %v1539 = vunpack.c.h.b16 %v895
        %v1540 = vunpack.c.l.b16 %v896
        %v1541 = vunpack.c.h.b16 %v896
        %v1542 = vunpack.c.l.b16 %v897
        %v1543 = vunpack.c.h.b16 %v897
        %v1544 = vunpack.c.l.b16 %v898
        %v1545 = vunpack.c.h.b16 %v898
        %v1546 = vunpack.c.l.b16 %v899
        %v1547 = vunpack.c.h.b16 %v899
        %v1548 = vunpack.c.l.b16 %v900
        %v1549 = vunpack.c.h.b16 %v900
        %v1550 = vunpack.c.l.b16 %v901
        %v1551 = vunpack.c.h.b16 %v901
        %v1552 = vunpack.c.l.b16 %v902
        %v1553 = vunpack.c.h.b16 %v902
        %v1554 = vunpack.c.l.b16 %v903
        %v1555 = vunpack.c.h.b16 %v903
        %v1556 = vunpack.c.l.b16 %v904
        %v1557 = vunpack.c.h.b16 %v904
        %v1558 = vunpack.c.l.b16 %v905
        %v1559 = vunpack.c.h.b16 %v905
        %v1560 = vunpack.c.l.b16 %v906
        %v1561 = vunpack.c.h.b16 %v906
        %v1562 = vunpack.c.l.b16 %v907
        %v1563 = vunpack.c.h.b16 %v907
        %v1564 = vunpack.c.l.b16 %v908
        %v1565 = vunpack.c.h.b16 %v908
        %v1566 = vunpack.c.l.b16 %v909
        %v1567 = vunpack.c.h.b16 %v909
        %v1568 = vunpack.c.l.b16 %v910
        %v1569 = vunpack.c.h.b16 %v910
        %v1570 = vunpack.c.l.b16 %v911
        %v1571 = vunpack.c.h.b16 %v911
        %v1572 = vunpack.c.l.b16 %v912
        %v1573 = vunpack.c.h.b16 %v912
        %v1574 = vunpack.c.l.b16 %v913
        %v1575 = vunpack.c.h.b16 %v913
        %v1576 = vunpack.c.l.b16 %v914
        %v1577 = vunpack.c.h.b16 %v914
        %v1578 = vunpack.c.l.b16 %v915
        %v1579 = vunpack.c.h.b16 %v915
        %v1580 = vunpack.c.l.b16 %v916
        %v1581 = vunpack.c.h.b16 %v916
        %v1582 = vunpack.c.l.b16 %v917
        %v1583 = vunpack.c.h.b16 %v917
        %v1584 = vunpack.c.l.b16 %v918
        %v1585 = vunpack.c.h.b16 %v918
        %v1586 = vunpack.c.l.b16 %v919
        %v1587 = vunpack.c.h.b16 %v919
        %v1588 = vunpack.c.l.b16 %v920
        %v1589 = vunpack.c.h.b16 %v920
        %v1590 = vunpack.c.l.b16 %v921
        %v1591 = vunpack.c.h.b16 %v921
        %v1592 = vunpack.c.l.b16 %v922
        %v1593 = vunpack.c.h.b16 %v922
        %v1594 = vunpack.c.l.b16 %v923
        %v1595 = vunpack.c.h.b16 %v923
        %v1596 = vunpack.c.l.b16 %v924
        %v1597 = vunpack.c.h.b16 %v924
        %v1598 = vunpack.c.l.b16 %v925
        %v1599 = vunpack.c.h.b16 %v925
        %v1600 = vunpack.c.l.b16 %v926
        %v1601 = vunpack.c.h.b16 %v926
        %v1602 = vunpack.c.l.b16 %v927
        %v1603 = vunpack.c.h.b16 %v927
        %v1604 = vunpack.c.l.b16 %v928
        %v1605 = vunpack.c.h.b16 %v928
        %v1606 = vunpack.c.l.b16 %v929
        %v1607 = vunpack.c.h.b16 %v929
        %v1608 = vunpack.c.l.b16 %v930
        %v1609 = vunpack.c.h.b16 %v930
        %v1610 = vunpack.c.l.b16 %v931
        %v1611 = vunpack.c.h.b16 %v931
        %v1612 = vunpack.c.l.b16 %v932
        %v1613 = vunpack.c.h.b16 %v932
        %v1614 = vunpack.c.l.b16 %v933
        %v1615 = vunpack.c.h.b16 %v933
        %v1616 = vunpack.c.l.b16 %v934
        %v1617 = vunpack.c.h.b16 %v934
        %v1618 = vunpack.c.l.b16 %v935
        %v1619 = vunpack.c.h.b16 %v935
        %v1620 = vunpack.c.l.b16 %v936
        %v1621 = vunpack.c.h.b16 %v936
        %v1622 = vunpack.c.l.b16 %v937
        %v1623 = vunpack.c.h.b16 %v937
        %v1624 = vunpack.c.l.b16 %v938
        %v1625 = vunpack.c.h.b16 %v938
        %v1626 = vunpack.c.l.b16 %v939
        %v1627 = vunpack.c.h.b16 %v939
        %v1628 = vunpack.c.l.b16 %v940
        %v1629 = vunpack.c.h.b16 %v940
        %v1630 = vunpack.c.l.b16 %v941
        %v1631 = vunpack.c.h.b16 %v941
        %v1632 = vunpack.c.l.b16 %v942
        %v1633 = vunpack.c.h.b16 %v942
        %v1634 = vunpack.c.l.b16 %v943
        %v1635 = vunpack.c.h.b16 %v943
        %v1636 = vunpack.c.l.b16 %v944
        %v1637 = vunpack.c.h.b16 %v944
        %v1638 = vunpack.c.l.b16 %v945
        %v1639 = vunpack.c.h.b16 %v945
        %v1640 = vunpack.c.l.b16 %v946
        %v1641 = vunpack.c.h.b16 %v946
        %v1642 = vunpack.c.l.b16 %v947
        %v1643 = vunpack.c.h.b16 %v947
        %v1644 = vunpack.c.l.b16 %v948
        %v1645 = vunpack.c.h.b16 %v948
        %v1646 = vunpack.c.l.b16 %v949
        %v1647 = vunpack.c.h.b16 %v949
        %v1648 = vunpack.c.l.b16 %v950
        %v1649 = vunpack.c.h.b16 %v950
        %v1650 = vunpack.c.l.b16 %v951
        %v1651 = vunpack.c.h.b16 %v951
        %v1652 = vunpack.c.l.b16 %v952
        %v1653 = vunpack.c.h.b16 %v952
        %v1654 = vunpack.c.l.b16 %v953
        %v1655 = vunpack.c.h.b16 %v953
        %v1656 = vunpack.c.l.b16 %v954
        %v1657 = vunpack.c.h.b16 %v954
        %v1658 = vunpack.c.l.b16 %v955
        %v1659 = vunpack.c.h.b16 %v955
        %v1660 = vunpack.c.l.b16 %v956
        %v1661 = vunpack.c.h.b16 %v956
        %v1662 = vunpack.c.l.b16 %v957
        %v1663 = vunpack.c.h.b16 %v957
        %v1664 = vunpack.c.l.b16 %v958
        %v1665 = vunpack.c.h.b16 %v958
        %v1666 = vunpack.c.l.b16 %v959
        %v1667 = vunpack.c.h.b16 %v959
        %v1668 = vunpack.c.l.b16 %v960
        %v1669 = vunpack.c.h.b16 %v960
        %v1670 = vunpack.c.l.b16 %v961
        %v1671 = vunpack.c.h.b16 %v961
        %v1672 = vunpack.c.l.b16 %v962
        %v1673 = vunpack.c.h.b16 %v962
        %v1674 = vunpack.c.l.b16 %v963
        %v1675 = vunpack.c.h.b16 %v963
        %v1676 = vunpack.c.l.b16 %v964
        %v1677 = vunpack.c.h.b16 %v964
        %v1678 = vunpack.c.l.b16 %v965
        %v1679 = vunpack.c.h.b16 %v965
        %v1680 = vunpack.c.l.b16 %v966
        %v1681 = vunpack.c.h.b16 %v966
        %v1682 = vunpack.c.l.b16 %v967
        %v1683 = vunpack.c.h.b16 %v967
        %v1684 = vunpack.c.l.b16 %v968
        %v1685 = vunpack.c.h.b16 %v968
        %v1686 = vunpack.c.l.b16 %v969
        %v1687 = vunpack.c.h.b16 %v969
        %v1688 = vunpack.c.l.b16 %v970
        %v1689 = vunpack.c.h.b16 %v970
        %v1690 = vunpack.c.l.b16 %v971
        %v1691 = vunpack.c.h.b16 %v971
        %v1692 = vunpack.c.l.b16 %v972
        %v1693 = vunpack.c.h.b16 %v972
        %v1694 = vunpack.c.l.b16 %v973
        %v1695 = vunpack.c.h.b16 %v973
        %v1696 = vunpack.c.l.b16 %v974
        %v1697 = vunpack.c.h.b16 %v974
        %v1698 = vunpack.c.l.b16 %v975
        %v1699 = vunpack.c.h.b16 %v975
        %v1700 = vunpack.c.l.b16 %v976
        %v1701 = vunpack.c.h.b16 %v976
        %v1702 = vunpack.c.l.b16 %v977
        %v1703 = vunpack.c.h.b16 %v977
        %v1704 = vunpack.c.l.b16 %v978
        %v1705 = vunpack.c.h.b16 %v978
        %v1706 = vunpack.c.l.b16 %v979
        %v1707 = vunpack.c.h.b16 %v979
        %v1708 = vunpack.c.l.b16 %v980
        %v1709 = vunpack.c.h.b16 %v980
        %v1710 = vunpack.c.l.b16 %v981
        %v1711 = vunpack.c.h.b16 %v981
        %v1712 = vunpack.c.l.b16 %v982
        %v1713 = vunpack.c.h.b16 %v982
        %v1714 = vunpack.c.l.b16 %v983
        %v1715 = vunpack.c.h.b16 %v983
        %v1716 = vunpack.c.l.b16 %v984
        %v1717 = vunpack.c.h.b16 %v984
        %v1718 = vunpack.c.l.b16 %v985
        %v1719 = vunpack.c.h.b16 %v985
        %v1720 = vunpack.c.l.b16 %v986
        %v1721 = vunpack.c.h.b16 %v986
        %v1722 = vunpack.c.l.b16 %v987
        %v1723 = vunpack.c.h.b16 %v987
        %v1724 = vunpack.c.l.b16 %v988
        %v1725 = vunpack.c.h.b16 %v988
        %v1726 = vunpack.c.l.b16 %v989
        %v1727 = vunpack.c.h.b16 %v989
        %v1728 = vunpack.c.l.b16 %v990
        %v1729 = vunpack.c.h.b16 %v990
        %v1730 = vunpack.c.l.b16 %v991
        %v1731 = vunpack.c.h.b16 %v991
        %v1732 = vunpack.c.l.b16 %v992
        %v1733 = vunpack.c.h.b16 %v992
        %v1734 = vunpack.c.l.b16 %v993
        %v1735 = vunpack.c.h.b16 %v993
        %v1736 = vunpack.c.l.b16 %v994
        %v1737 = vunpack.c.h.b16 %v994
        %v1738 = vunpack.c.l.b16 %v995
        %v1739 = vunpack.c.h.b16 %v995
        %v1740 = vunpack.c.l.b16 %v996
        %v1741 = vunpack.c.h.b16 %v996
        %v1742 = vunpack.c.l.b16 %v997
        %v1743 = vunpack.c.h.b16 %v997
        %v1744 = vunpack.c.l.b16 %v998
        %v1745 = vunpack.c.h.b16 %v998
        %v1746 = vunpack.c.l.b16 %v999
        %v1747 = vunpack.c.h.b16 %v999
        %v1748 = vunpack.c.l.b16 %v1000
        %v1749 = vunpack.c.h.b16 %v1000
        %v1750 = vunpack.c.l.b16 %v1001
        %v1751 = vunpack.c.h.b16 %v1001
        %v1752 = vunpack.c.l.b16 %v1002
        %v1753 = vunpack.c.h.b16 %v1002
        %v1754 = vunpack.c.l.b16 %v1003
        %v1755 = vunpack.c.h.b16 %v1003
        %v1756 = vunpack.c.l.b16 %v1004
        %v1757 = vunpack.c.h.b16 %v1004
        %v1758 = vunpack.c.l.b16 %v1005
        %v1759 = vunpack.c.h.b16 %v1005
        %v1760 = vunpack.c.l.b16 %v1006
        %v1761 = vunpack.c.h.b16 %v1006
        %v1762 = vunpack.c.l.b16 %v1007
        %v1763 = vunpack.c.h.b16 %v1007
        %v1764 = vunpack.c.l.b16 %v1008
        %v1765 = vunpack.c.h.b16 %v1008
        %v1766 = vunpack.c.l.b16 %v1009
        %v1767 = vunpack.c.h.b16 %v1009
        %v1768 = vunpack.c.l.b16 %v1010
        %v1769 = vunpack.c.h.b16 %v1010
        %v1770 = vunpack.c.l.b16 %v1011
        %v1771 = vunpack.c.h.b16 %v1011
        %v1772 = vunpack.c.l.b16 %v1012
        %v1773 = vunpack.c.h.b16 %v1012
        %v1774 = vunpack.c.l.b16 %v1013
        %v1775 = vunpack.c.h.b16 %v1013
        %v1776 = vunpack.c.l.b16 %v1014
        %v1777 = vunpack.c.h.b16 %v1014
        %v1778 = vunpack.c.l.b16 %v1015
        %v1779 = vunpack.c.h.b16 %v1015
        %v1780 = vunpack.c.l.b16 %v1016
        %v1781 = vunpack.c.h.b16 %v1016
        %v1782 = vunpack.c.l.b16 %v1017
        %v1783 = vunpack.c.h.b16 %v1017
        %v1784 = vunpack.c.l.b16 %v1018
        %v1785 = vunpack.c.h.b16 %v1018
        %v1786 = vunpack.c.l.b16 %v1019
        %v1787 = vunpack.c.h.b16 %v1019
        %v1788 = vunpack.c.l.b16 %v1020
        %v1789 = vunpack.c.h.b16 %v1020
        %v1790 = vunpack.c.l.b16 %v1021
        %v1791 = vunpack.c.h.b16 %v1021
        %v1792 = vunpack.c.l.b16 %v1022
        %v1793 = vunpack.c.h.b16 %v1022
        %v1794 = vunpack.c.l.b16 %v1023
        %v1795 = vunpack.c.h.b16 %v1023
        %v1796 = vunpack.c.l.b16 %v1024
        %v1797 = vunpack.c.h.b16 %v1024
        %v1798 = vunpack.c.l.b16 %v1025
        %v1799 = vunpack.c.h.b16 %v1025
        %v1800 = vunpack.c.l.b16 %v1026
        %v1801 = vunpack.c.h.b16 %v1026
        %v1802 = vunpack.c.l.b16 %v1027
        %v1803 = vunpack.c.h.b16 %v1027
        %v1804 = vunpack.c.l.b16 %v1028
        %v1805 = vunpack.c.h.b16 %v1028
        %v1806 = vunpack.c.l.b16 %v1029
        %v1807 = vunpack.c.h.b16 %v1029
        %v1808 = vunpack.c.l.b16 %v1030
        %v1809 = vunpack.c.h.b16 %v1030
        %v1810 = vunpack.c.l.b16 %v1031
        %v1811 = vunpack.c.h.b16 %v1031
        %v1812 = vunpack.c.l.b16 %v1032
        %v1813 = vunpack.c.h.b16 %v1032
        %v1814 = vunpack.c.l.b16 %v1033
        %v1815 = vunpack.c.h.b16 %v1033
        %v1816 = vunpack.c.l.b16 %v1034
        %v1817 = vunpack.c.h.b16 %v1034
        %v1818 = vunpack.c.l.b16 %v1035
        %v1819 = vunpack.c.h.b16 %v1035
        %v1820 = vunpack.c.l.b16 %v1036
        %v1821 = vunpack.c.h.b16 %v1036
        %v1822 = vunpack.c.l.b16 %v1037
        %v1823 = vunpack.c.h.b16 %v1037
        %v1824 = vunpack.c.l.b16 %v1038
        %v1825 = vunpack.c.h.b16 %v1038
        %v1826 = vunpack.c.l.b16 %v1039
        %v1827 = vunpack.c.h.b16 %v1039
        %v1828 = vunpack.c.l.b16 %v1040
        %v1829 = vunpack.c.h.b16 %v1040
        %v1830 = vunpack.c.l.b16 %v1041
        %v1831 = vunpack.c.h.b16 %v1041
        %v1832 = vpack.c.b16 %v1324, %v1320
        %v1833 = vpack.c.b16 %v1325, %v1321
        %v1834 = vpack.c.b16 %v1326, %v1322
        %v1835 = vpack.c.b16 %v1327, %v1323
        %v1836 = vpack.c.b16 %v1332, %v1328
        %v1837 = vpack.c.b16 %v1333, %v1329
        %v1838 = vpack.c.b16 %v1334, %v1330
        %v1839 = vpack.c.b16 %v1335, %v1331
        %v1840 = vpack.c.b16 %v1340, %v1336
        %v1841 = vpack.c.b16 %v1341, %v1337
        %v1842 = vpack.c.b16 %v1342, %v1338
        %v1843 = vpack.c.b16 %v1343, %v1339
        %v1844 = vpack.c.b16 %v1348, %v1344
        %v1845 = vpack.c.b16 %v1349, %v1345
        %v1846 = vpack.c.b16 %v1350, %v1346
        %v1847 = vpack.c.b16 %v1351, %v1347
        %v1848 = vpack.c.b16 %v1356, %v1352
        %v1849 = vpack.c.b16 %v1357, %v1353
        %v1850 = vpack.c.b16 %v1358, %v1354
        %v1851 = vpack.c.b16 %v1359, %v1355
        %v1852 = vpack.c.b16 %v1364, %v1360
        %v1853 = vpack.c.b16 %v1365, %v1361
        %v1854 = vpack.c.b16 %v1366, %v1362
        %v1855 = vpack.c.b16 %v1367, %v1363
        %v1856 = vpack.c.b16 %v1372, %v1368
        %v1857 = vpack.c.b16 %v1373, %v1369
        %v1858 = vpack.c.b16 %v1374, %v1370
        %v1859 = vpack.c.b16 %v1375, %v1371
        %v1860 = vpack.c.b16 %v1380, %v1376
        %v1861 = vpack.c.b16 %v1381, %v1377
        %v1862 = vpack.c.b16 %v1382, %v1378
        %v1863 = vpack.c.b16 %v1383, %v1379
        %v1864 = vpack.c.b16 %v1388, %v1384
        %v1865 = vpack.c.b16 %v1389, %v1385
        %v1866 = vpack.c.b16 %v1390, %v1386
        %v1867 = vpack.c.b16 %v1391, %v1387
        %v1868 = vpack.c.b16 %v1396, %v1392
        %v1869 = vpack.c.b16 %v1397, %v1393
        %v1870 = vpack.c.b16 %v1398, %v1394
        %v1871 = vpack.c.b16 %v1399, %v1395
        %v1872 = vpack.c.b16 %v1404, %v1400
        %v1873 = vpack.c.b16 %v1405, %v1401
        %v1874 = vpack.c.b16 %v1406, %v1402
        %v1875 = vpack.c.b16 %v1407, %v1403
        %v1876 = vpack.c.b16 %v1412, %v1408
        %v1877 = vpack.c.b16 %v1413, %v1409
        %v1878 = vpack.c.b16 %v1414, %v1410
        %v1879 = vpack.c.b16 %v1415, %v1411
        %v1880 = vpack.c.b16 %v1420, %v1416
        %v1881 = vpack.c.b16 %v1421, %v1417
        %v1882 = vpack.c.b16 %v1422, %v1418
        %v1883 = vpack.c.b16 %v1423, %v1419
        %v1884 = vpack.c.b16 %v1428, %v1424
        %v1885 = vpack.c.b16 %v1429, %v1425
        %v1886 = vpack.c.b16 %v1430, %v1426
        %v1887 = vpack.c.b16 %v1431, %v1427
        %v1888 = vpack.c.b16 %v1436, %v1432
        %v1889 = vpack.c.b16 %v1437, %v1433
        %v1890 = vpack.c.b16 %v1438, %v1434
        %v1891 = vpack.c.b16 %v1439, %v1435
        %v1892 = vpack.c.b16 %v1444, %v1440
        %v1893 = vpack.c.b16 %v1445, %v1441
        %v1894 = vpack.c.b16 %v1446, %v1442
        %v1895 = vpack.c.b16 %v1447, %v1443
        %v1896 = vpack.c.b16 %v1452, %v1448
        %v1897 = vpack.c.b16 %v1453, %v1449
        %v1898 = vpack.c.b16 %v1454, %v1450
        %v1899 = vpack.c.b16 %v1455, %v1451
        %v1900 = vpack.c.b16 %v1460, %v1456
        %v1901 = vpack.c.b16 %v1461, %v1457
        %v1902 = vpack.c.b16 %v1462, %v1458
        %v1903 = vpack.c.b16 %v1463, %v1459
        %v1904 = vpack.c.b16 %v1468, %v1464
        %v1905 = vpack.c.b16 %v1469, %v1465
        %v1906 = vpack.c.b16 %v1470, %v1466
        %v1907 = vpack.c.b16 %v1471, %v1467
        %v1908 = vpack.c.b16 %v1476, %v1472
        %v1909 = vpack.c.b16 %v1477, %v1473
        %v1910 = vpack.c.b16 %v1478, %v1474
        %v1911 = vpack.c.b16 %v1479, %v1475
        %v1912 = vpack.c.b16 %v1484, %v1480
        %v1913 = vpack.c.b16 %v1485, %v1481
        %v1914 = vpack.c.b16 %v1486, %v1482
        %v1915 = vpack.c.b16 %v1487, %v1483
        %v1916 = vpack.c.b16 %v1492, %v1488
        %v1917 = vpack.c.b16 %v1493, %v1489
        %v1918 = vpack.c.b16 %v1494, %v1490
        %v1919 = vpack.c.b16 %v1495, %v1491
        %v1920 = vpack.c.b16 %v1500, %v1496
        %v1921 = vpack.c.b16 %v1501, %v1497
        %v1922 = vpack.c.b16 %v1502, %v1498
        %v1923 = vpack.c.b16 %v1503, %v1499
        %v1924 = vpack.c.b16 %v1508, %v1504
        %v1925 = vpack.c.b16 %v1509, %v1505
        %v1926 = vpack.c.b16 %v1510, %v1506
        %v1927 = vpack.c.b16 %v1511, %v1507
        %v1928 = vpack.c.b16 %v1516, %v1512
        %v1929 = vpack.c.b16 %v1517, %v1513
        %v1930 = vpack.c.b16 %v1518, %v1514
        %v1931 = vpack.c.b16 %v1519, %v1515
        %v1932 = vpack.c.b16 %v1524, %v1520
        %v1933 = vpack.c.b16 %v1525, %v1521
        %v1934 = vpack.c.b16 %v1526, %v1522
        %v1935 = vpack.c.b16 %v1527, %v1523
        %v1936 = vpack.c.b16 %v1532, %v1528
        %v1937 = vpack.c.b16 %v1533, %v1529
        %v1938 = vpack.c.b16 %v1534, %v1530
        %v1939 = vpack.c.b16 %v1535, %v1531
        %v1940 = vpack.c.b16 %v1540, %v1536
        %v1941 = vpack.c.b16 %v1541, %v1537
        %v1942 = vpack.c.b16 %v1542, %v1538
        %v1943 = vpack.c.b16 %v1543, %v1539
        %v1944 = vpack.c.b16 %v1548, %v1544
        %v1945 = vpack.c.b16 %v1549, %v1545
        %v1946 = vpack.c.b16 %v1550, %v1546
        %v1947 = vpack.c.b16 %v1551, %v1547
        %v1948 = vpack.c.b16 %v1556, %v1552
        %v1949 = vpack.c.b16 %v1557, %v1553
        %v1950 = vpack.c.b16 %v1558, %v1554
        %v1951 = vpack.c.b16 %v1559, %v1555
        %v1952 = vpack.c.b16 %v1564, %v1560
        %v1953 = vpack.c.b16 %v1565, %v1561
        %v1954 = vpack.c.b16 %v1566, %v1562
        %v1955 = vpack.c.b16 %v1567, %v1563
        %v1956 = vpack.c.b16 %v1572, %v1568
        %v1957 = vpack.c.b16 %v1573, %v1569
        %v1958 = vpack.c.b16 %v1574, %v1570
        %v1959 = vpack.c.b16 %v1575, %v1571
        %v1960 = vpack.c.b16 %v1580, %v1576
        %v1961 = vpack.c.b16 %v1581, %v1577
        %v1962 = vpack.c.b16 %v1582, %v1578
        %v1963 = vpack.c.b16 %v1583, %v1579
        %v1964 = vpack.c.b16 %v1588, %v1584
        %v1965 = vpack.c.b16 %v1589, %v1585
        %v1966 = vpack.c.b16 %v1590, %v1586
        %v1967 = vpack.c.b16 %v1591, %v1587
        %v1968 = vpack.c.b16 %v1596, %v1592
        %v1969 = vpack.c.b16 %v1597, %v1593
        %v1970 = vpack.c.b16 %v1598, %v1594
        %v1971 = vpack.c.b16 %v1599, %v1595
        %v1972 = vpack.c.b16 %v1604, %v1600
        %v1973 = vpack.c.b16 %v1605, %v1601
        %v1974 = vpack.c.b16 %v1606, %v1602
        %v1975 = vpack.c.b16 %v1607, %v1603
        %v1976 = vpack.c.b16 %v1612, %v1608
        %v1977 = vpack.c.b16 %v1613, %v1609
        %v1978 = vpack.c.b16 %v1614, %v1610
        %v1979 = vpack.c.b16 %v1615, %v1611
        %v1980 = vpack.c.b16 %v1620, %v1616
        %v1981 = vpack.c.b16 %v1621, %v1617
        %v1982 = vpack.c.b16 %v1622, %v1618
        %v1983 = vpack.c.b16 %v1623, %v1619
        %v1984 = vpack.c.b16 %v1628, %v1624
        %v1985 = vpack.c.b16 %v1629, %v1625
        %v1986 = vpack.c.b16 %v1630, %v1626
        %v1987 = vpack.c.b16 %v1631, %v1627
        %v1988 = vpack.c.b16 %v1636, %v1632
        %v1989 = vpack.c.b16 %v1637, %v1633
        %v1990 = vpack.c.b16 %v1638, %v1634
        %v1991 = vpack.c.b16 %v1639, %v1635
        %v1992 = vpack.c.b16 %v1644, %v1640
        %v1993 = vpack.c.b16 %v1645, %v1641
        %v1994 = vpack.c.b16 %v1646, %v1642
        %v1995 = vpack.c.b16 %v1647, %v1643
        %v1996 = vpack.c.b16 %v1652, %v1648
        %v1997 = vpack.c.b16 %v1653, %v1649
        %v1998 = vpack.c.b16 %v1654, %v1650
        %v1999 = vpack.c.b16 %v1655, %v1651
        %v2000 = vpack.c.b16 %v1660, %v1656
        %v2001 = vpack.c.b16 %v1661, %v1657
        %v2002 = vpack.c.b16 %v1662, %v1658
        %v2003 = vpack.c.b16 %v1663, %v1659
        %v2004 = vpack.c.b16 %v1668, %v1664
        %v2005 = vpack.c.b16 %v1669, %v1665
        %v2006 = vpack.c.b16 %v1670, %v1666
        %v2007 = vpack.c.b16 %v1671, %v1667
        %v2008 = vpack.c.b16 %v1676, %v1672
        %v2009 = vpack.c.b16 %v1677, %v1673
        %v2010 = vpack.c.b16 %v1678, %v1674
        %v2011 = vpack.c.b16 %v1679, %v1675
        %v2012 = vpack.c.b16 %v1684, %v1680
        %v2013 = vpack.c.b16 %v1685, %v1681
        %v2014 = vpack.c.b16 %v1686, %v1682
        %v2015 = vpack.c.b16 %v1687, %v1683
        %v2016 = vpack.c.b16 %v1692, %v1688
        %v2017 = vpack.c.b16 %v1693, %v1689
        %v2018 = vpack.c.b16 %v1694, %v1690
        %v2019 = vpack.c.b16 %v1695, %v1691
        %v2020 = vpack.c.b16 %v1700, %v1696
        %v2021 = vpack.c.b16 %v1701, %v1697
        %v2022 = vpack.c.b16 %v1702, %v1698
        %v2023 = vpack.c.b16 %v1703, %v1699
        %v2024 = vpack.c.b16 %v1708, %v1704
        %v2025 = vpack.c.b16 %v1709, %v1705
        %v2026 = vpack.c.b16 %v1710, %v1706
        %v2027 = vpack.c.b16 %v1711, %v1707
        %v2028 = vpack.c.b16 %v1716, %v1712
        %v2029 = vpack.c.b16 %v1717, %v1713
        %v2030 = vpack.c.b16 %v1718, %v1714
        %v2031 = vpack.c.b16 %v1719, %v1715
        %v2032 = vpack.c.b16 %v1724, %v1720
        %v2033 = vpack.c.b16 %v1725, %v1721
        %v2034 = vpack.c.b16 %v1726, %v1722
        %v2035 = vpack.c.b16 %v1727, %v1723
        %v2036 = vpack.c.b16 %v1732, %v1728
        %v2037 = vpack.c.b16 %v1733, %v1729
        %v2038 = vpack.c.b16 %v1734, %v1730
        %v2039 = vpack.c.b16 %v1735, %v1731
        %v2040 = vpack.c.b16 %v1740, %v1736
        %v2041 = vpack.c.b16 %v1741, %v1737
        %v2042 = vpack.c.b16 %v1742, %v1738
        %v2043 = vpack.c.b16 %v1743, %v1739
        %v2044 = vpack.c.b16 %v1748, %v1744
        %v2045 = vpack.c.b16 %v1749, %v1745
        %v2046 = vpack.c.b16 %v1750, %v1746
        %v2047 = vpack.c.b16 %v1751, %v1747
        %v2048 = vpack.c.b16 %v1756, %v1752
        %v2049 = vpack.c.b16 %v1757, %v1753
        %v2050 = vpack.c.b16 %v1758, %v1754
        %v2051 = vpack.c.b16 %v1759, %v1755
        %v2052 = vpack.c.b16 %v1764, %v1760
        %v2053 = vpack.c.b16 %v1765, %v1761
        %v2054 = vpack.c.b16 %v1766, %v1762
        %v2055 = vpack.c.b16 %v1767, %v1763
        %v2056 = vpack.c.b16 %v1772, %v1768
        %v2057 = vpack.c.b16 %v1773, %v1769
        %v2058 = vpack.c.b16 %v1774, %v1770
        %v2059 = vpack.c.b16 %v1775, %v1771
        %v2060 = vpack.c.b16 %v1780, %v1776
        %v2061 = vpack.c.b16 %v1781, %v1777
        %v2062 = vpack.c.b16 %v1782, %v1778
        %v2063 = vpack.c.b16 %v1783, %v1779
        %v2064 = vpack.c.b16 %v1788, %v1784
        %v2065 = vpack.c.b16 %v1789, %v1785
        %v2066 = vpack.c.b16 %v1790, %v1786
        %v2067 = vpack.c.b16 %v1791, %v1787
        %v2068 = vpack.c.b16 %v1796, %v1792
        %v2069 = vpack.c.b16 %v1797, %v1793
        %v2070 = vpack.c.b16 %v1798, %v1794
        %v2071 = vpack.c.b16 %v1799, %v1795
        %v2072 = vpack.c.b16 %v1804, %v1800
        %v2073 = vpack.c.b16 %v1805, %v1801
        %v2074 = vpack.c.b16 %v1806, %v1802
        %v2075 = vpack.c.b16 %v1807, %v1803
        %v2076 = vpack.c.b16 %v1812, %v1808
        %v2077 = vpack.c.b16 %v1813, %v1809
        %v2078 = vpack.c.b16 %v1814, %v1810
        %v2079 = vpack.c.b16 %v1815, %v1811
        %v2080 = vpack.c.b16 %v1820, %v1816
        %v2081 = vpack.c.b16 %v1821, %v1817
        %v2082 = vpack.c.b16 %v1822, %v1818
        %v2083 = vpack.c.b16 %v1823, %v1819
        %v2084 = vpack.c.b16 %v1828, %v1824
        %v2085 = vpack.c.b16 %v1829, %v1825
        %v2086 = vpack.c.b16 %v1830, %v1826
        %v2087 = vpack.c.b16 %v1831, %v1827
        %2344 = vmatprep.subr.bf16.mxu0 %v1833
        %2345 = vmatpush1.bf16.msra.mxu0 %v1832
        %2346 = vmatprep.subr.bf16.mxu0 %v1837
        %2347 = vmatpush1.bf16.msra.mxu0 %v1836
        %2348 = vmatprep.subr.bf16.mxu0 %v1841
        %2349 = vmatpush1.bf16.msra.mxu0 %v1840
        %2350 = vmatprep.subr.bf16.mxu0 %v1845
        %2351 = vmatpush1.bf16.msra.mxu0 %v1844
        %2352 = vmatprep.subr.bf16.mxu0 %v1849
        %2353 = vmatpush1.bf16.msra.mxu0 %v1848
        %2354 = vmatprep.subr.bf16.mxu0 %v1853
        %2355 = vmatpush1.bf16.msra.mxu0 %v1852
        %2356 = vmatprep.subr.bf16.mxu0 %v1857
        %2357 = vmatpush1.bf16.msra.mxu0 %v1856
        %2358 = vmatprep.subr.bf16.mxu0 %v1861
        %2359 = vmatpush1.bf16.msra.mxu0 %v1860
        %2360 = vmatprep.subr.bf16.mxu0 %v1865
        %2361 = vmatpush1.bf16.msra.mxu0 %v1864
        %2362 = vmatprep.subr.bf16.mxu0 %v1869
        %2363 = vmatpush1.bf16.msra.mxu0 %v1868
        %2364 = vmatprep.subr.bf16.mxu0 %v1873
        %2365 = vmatpush1.bf16.msra.mxu0 %v1872
        %2366 = vmatprep.subr.bf16.mxu0 %v1877
        %2367 = vmatpush1.bf16.msra.mxu0 %v1876
        %2368 = vmatprep.subr.bf16.mxu0 %v1881
        %2369 = vmatpush1.bf16.msra.mxu0 %v1880
        %2370 = vmatprep.subr.bf16.mxu0 %v1885
        %2371 = vmatpush1.bf16.msra.mxu0 %v1884
        %2372 = vmatprep.subr.bf16.mxu0 %v1889
        %2373 = vmatpush1.bf16.msra.mxu0 %v1888
        %2374 = vmatprep.subr.bf16.mxu0 %v1893
        %2375 = vmatpush1.bf16.msra.mxu0 %v1892
        %2376 = vmatprep.mubr.bf16.mxu0 %v779
        %2377 = vmatmul.mubr.bf16.gmra.mrb[0].mxu0 %v778
        %v2378 = vpop.f32.mrb[0].mxu0
        %v2379 = vadd.f32 %v1047, %v2378
        %v2380 = vpop.f32.mrb[0].mxu0
        %v2381 = vadd.f32 %v1051, %v2380
        %v2382 = vpop.f32.mrb[0].mxu0
        %v2383 = vpop.f32.mrb[0].mxu0
        %2384 = vdwg.mxu0
        %2385 = vmatprep.subr.bf16.mxu0 %v1897
        %2386 = vmatpush1.bf16.msra.mxu0 %v1896
        %2387 = vmatprep.subr.bf16.mxu0 %v1901
        %2388 = vmatpush1.bf16.msra.mxu0 %v1900
        %2389 = vmatprep.subr.bf16.mxu0 %v1905
        %2390 = vmatpush1.bf16.msra.mxu0 %v1904
        %2391 = vmatprep.subr.bf16.mxu0 %v1909
        %2392 = vmatpush1.bf16.msra.mxu0 %v1908
        %2393 = vmatprep.subr.bf16.mxu0 %v1913
        %2394 = vmatpush1.bf16.msra.mxu0 %v1912
        %2395 = vmatprep.subr.bf16.mxu0 %v1917
        %2396 = vmatpush1.bf16.msra.mxu0 %v1916
        %2397 = vmatprep.subr.bf16.mxu0 %v1921
        %2398 = vmatpush1.bf16.msra.mxu0 %v1920
        %2399 = vmatprep.subr.bf16.mxu0 %v1925
        %2400 = vmatpush1.bf16.msra.mxu0 %v1924
        %2401 = vmatprep.subr.bf16.mxu0 %v1929
        %2402 = vmatpush1.bf16.msra.mxu0 %v1928
        %2403 = vmatprep.subr.bf16.mxu0 %v1933
        %2404 = vmatpush1.bf16.msra.mxu0 %v1932
        %2405 = vmatprep.subr.bf16.mxu0 %v1937
        %2406 = vmatpush1.bf16.msra.mxu0 %v1936
        %2407 = vmatprep.subr.bf16.mxu0 %v1941
        %2408 = vmatpush1.bf16.msra.mxu0 %v1940
        %2409 = vmatprep.subr.bf16.mxu0 %v1945
        %2410 = vmatpush1.bf16.msra.mxu0 %v1944
        %2411 = vmatprep.subr.bf16.mxu0 %v1949
        %2412 = vmatpush1.bf16.msra.mxu0 %v1948
        %2413 = vmatprep.subr.bf16.mxu0 %v1953
        %2414 = vmatpush1.bf16.msra.mxu0 %v1952
        %2415 = vmatprep.subr.bf16.mxu0 %v1957
        %2416 = vmatpush1.bf16.msra.mxu0 %v1956
        %2417 = vmatprep.mubr.bf16.mxu0 %v781
        %2418 = vmatmul.mubr.bf16.gmra.mrb[0].mxu0 %v780
        %v2419 = vpop.f32.mrb[0].mxu0
        %v2420 = vadd.f32 %v2379, %v2419
        %v2421 = vpop.f32.mrb[0].mxu0
        %v2422 = vadd.f32 %v2381, %v2421
        %v2423 = vpop.f32.mrb[0].mxu0
        %v2424 = vpop.f32.mrb[0].mxu0
        %2425 = vdwg.mxu0
        %2426 = vmatprep.subr.bf16.mxu0 %v1961
        %2427 = vmatpush1.bf16.msra.mxu0 %v1960
        %2428 = vmatprep.subr.bf16.mxu0 %v1965
        %2429 = vmatpush1.bf16.msra.mxu0 %v1964
        %2430 = vmatprep.subr.bf16.mxu0 %v1969
        %2431 = vmatpush1.bf16.msra.mxu0 %v1968
        %2432 = vmatprep.subr.bf16.mxu0 %v1973
        %2433 = vmatpush1.bf16.msra.mxu0 %v1972
        %2434 = vmatprep.subr.bf16.mxu0 %v1977
        %2435 = vmatpush1.bf16.msra.mxu0 %v1976
        %2436 = vmatprep.subr.bf16.mxu0 %v1981
        %2437 = vmatpush1.bf16.msra.mxu0 %v1980
        %2438 = vmatprep.subr.bf16.mxu0 %v1985
        %2439 = vmatpush1.bf16.msra.mxu0 %v1984
        %2440 = vmatprep.subr.bf16.mxu0 %v1989
        %2441 = vmatpush1.bf16.msra.mxu0 %v1988
        %2442 = vmatprep.subr.bf16.mxu0 %v1993
        %2443 = vmatpush1.bf16.msra.mxu0 %v1992
        %2444 = vmatprep.subr.bf16.mxu0 %v1997
        %2445 = vmatpush1.bf16.msra.mxu0 %v1996
        %2446 = vmatprep.subr.bf16.mxu0 %v2001
        %2447 = vmatpush1.bf16.msra.mxu0 %v2000
        %2448 = vmatprep.subr.bf16.mxu0 %v2005
        %2449 = vmatpush1.bf16.msra.mxu0 %v2004
        %2450 = vmatprep.subr.bf16.mxu0 %v2009
        %2451 = vmatpush1.bf16.msra.mxu0 %v2008
        %2452 = vmatprep.subr.bf16.mxu0 %v2013
        %2453 = vmatpush1.bf16.msra.mxu0 %v2012
        %2454 = vmatprep.subr.bf16.mxu0 %v2017
        %2455 = vmatpush1.bf16.msra.mxu0 %v2016
        %2456 = vmatprep.subr.bf16.mxu0 %v2021
        %2457 = vmatpush1.bf16.msra.mxu0 %v2020
        %2458 = vmatprep.mubr.bf16.mxu0 %v783
        %2459 = vmatmul.mubr.bf16.gmra.mrb[0].mxu0 %v782
        %v2460 = vpop.f32.mrb[0].mxu0
        %v2461 = vadd.f32 %v2420, %v2460
        %v2462 = vpop.f32.mrb[0].mxu0
        %v2463 = vadd.f32 %v2422, %v2462
        %v2464 = vpop.f32.mrb[0].mxu0
        %v2465 = vpop.f32.mrb[0].mxu0
        %2466 = vdwg.mxu0
        %2467 = vmatprep.subr.bf16.mxu0 %v2025
        %2468 = vmatpush1.bf16.msra.mxu0 %v2024
        %2469 = vmatprep.subr.bf16.mxu0 %v2029
        %2470 = vmatpush1.bf16.msra.mxu0 %v2028
        %2471 = vmatprep.subr.bf16.mxu0 %v2033
        %2472 = vmatpush1.bf16.msra.mxu0 %v2032
        %2473 = vmatprep.subr.bf16.mxu0 %v2037
        %2474 = vmatpush1.bf16.msra.mxu0 %v2036
        %2475 = vmatprep.subr.bf16.mxu0 %v2041
        %2476 = vmatpush1.bf16.msra.mxu0 %v2040
        %2477 = vmatprep.subr.bf16.mxu0 %v2045
        %2478 = vmatpush1.bf16.msra.mxu0 %v2044
        %2479 = vmatprep.subr.bf16.mxu0 %v2049
        %2480 = vmatpush1.bf16.msra.mxu0 %v2048
        %2481 = vmatprep.subr.bf16.mxu0 %v2053
        %2482 = vmatpush1.bf16.msra.mxu0 %v2052
        %2483 = vmatprep.subr.bf16.mxu0 %v2057
        %2484 = vmatpush1.bf16.msra.mxu0 %v2056
        %2485 = vmatprep.subr.bf16.mxu0 %v2061
        %2486 = vmatpush1.bf16.msra.mxu0 %v2060
        %2487 = vmatprep.subr.bf16.mxu0 %v2065
        %2488 = vmatpush1.bf16.msra.mxu0 %v2064
        %2489 = vmatprep.subr.bf16.mxu0 %v2069
        %2490 = vmatpush1.bf16.msra.mxu0 %v2068
        %2491 = vmatprep.subr.bf16.mxu0 %v2073
        %2492 = vmatpush1.bf16.msra.mxu0 %v2072
        %2493 = vmatprep.subr.bf16.mxu0 %v2077
        %2494 = vmatpush1.bf16.msra.mxu0 %v2076
        %2495 = vmatprep.subr.bf16.mxu0 %v2081
        %2496 = vmatpush1.bf16.msra.mxu0 %v2080
        %2497 = vmatprep.subr.bf16.mxu0 %v2085
        %2498 = vmatpush1.bf16.msra.mxu0 %v2084
        %2499 = vmatprep.mubr.bf16.mxu0 %v785
        %2500 = vmatmul.mubr.bf16.gmra.mrb[0].mxu0 %v784
        %v2501 = vpop.f32.mrb[0].mxu0
        %v2502 = vadd.f32 %v2461, %v2501
        %v2503 = vpop.f32.mrb[0].mxu0
        %v2504 = vadd.f32 %v2463, %v2503
        %v2505 = vpop.f32.mrb[0].mxu0
        %v2506 = vpop.f32.mrb[0].mxu0
        %2507 = vdwg.mxu0
        %2508 = vmatprep.subr.bf16.mxu0 %v1835
        %2509 = vmatpush1.bf16.msra.mxu0 %v1834
        %2510 = vmatprep.subr.bf16.mxu0 %v1839
        %2511 = vmatpush1.bf16.msra.mxu0 %v1838
        %2512 = vmatprep.subr.bf16.mxu0 %v1843
        %2513 = vmatpush1.bf16.msra.mxu0 %v1842
        %2514 = vmatprep.subr.bf16.mxu0 %v1847
        %2515 = vmatpush1.bf16.msra.mxu0 %v1846
        %2516 = vmatprep.subr.bf16.mxu0 %v1851
        %2517 = vmatpush1.bf16.msra.mxu0 %v1850
        %2518 = vmatprep.subr.bf16.mxu0 %v1855
        %2519 = vmatpush1.bf16.msra.mxu0 %v1854
        %2520 = vmatprep.subr.bf16.mxu0 %v1859
        %2521 = vmatpush1.bf16.msra.mxu0 %v1858
        %2522 = vmatprep.subr.bf16.mxu0 %v1863
        %2523 = vmatpush1.bf16.msra.mxu0 %v1862
        %2524 = vmatprep.subr.bf16.mxu0 %v1867
        %2525 = vmatpush1.bf16.msra.mxu0 %v1866
        %2526 = vmatprep.subr.bf16.mxu0 %v1871
        %2527 = vmatpush1.bf16.msra.mxu0 %v1870
        %2528 = vmatprep.subr.bf16.mxu0 %v1875
        %2529 = vmatpush1.bf16.msra.mxu0 %v1874
        %2530 = vmatprep.subr.bf16.mxu0 %v1879
        %2531 = vmatpush1.bf16.msra.mxu0 %v1878
        %2532 = vmatprep.subr.bf16.mxu0 %v1883
        %2533 = vmatpush1.bf16.msra.mxu0 %v1882
        %2534 = vmatprep.subr.bf16.mxu0 %v1887
        %2535 = vmatpush1.bf16.msra.mxu0 %v1886
        %2536 = vmatprep.subr.bf16.mxu0 %v1891
        %2537 = vmatpush1.bf16.msra.mxu0 %v1890
        %2538 = vmatprep.subr.bf16.mxu0 %v1895
        %2539 = vmatpush1.bf16.msra.mxu0 %v1894
        %2540 = vmatprep.mubr.bf16.mxu0 %v779
        %2541 = vmatmul.mubr.bf16.gmra.mrb[0].mxu0 %v778
        %v2542 = vpop.f32.mrb[0].mxu0
        %v2543 = vadd.f32 %v1055, %v2542
        %v2544 = vpop.f32.mrb[0].mxu0
        %v2545 = vadd.f32 %v1059, %v2544
        %v2546 = vpop.f32.mrb[0].mxu0
        %v2547 = vpop.f32.mrb[0].mxu0
        %2548 = vdwg.mxu0
        %2549 = vmatprep.subr.bf16.mxu0 %v1899
        %2550 = vmatpush1.bf16.msra.mxu0 %v1898
        %2551 = vmatprep.subr.bf16.mxu0 %v1903
        %2552 = vmatpush1.bf16.msra.mxu0 %v1902
        %2553 = vmatprep.subr.bf16.mxu0 %v1907
        %2554 = vmatpush1.bf16.msra.mxu0 %v1906
        %2555 = vmatprep.subr.bf16.mxu0 %v1911
        %2556 = vmatpush1.bf16.msra.mxu0 %v1910
        %2557 = vmatprep.subr.bf16.mxu0 %v1915
        %2558 = vmatpush1.bf16.msra.mxu0 %v1914
        %2559 = vmatprep.subr.bf16.mxu0 %v1919
        %2560 = vmatpush1.bf16.msra.mxu0 %v1918
        %2561 = vmatprep.subr.bf16.mxu0 %v1923
        %2562 = vmatpush1.bf16.msra.mxu0 %v1922
        %2563 = vmatprep.subr.bf16.mxu0 %v1927
        %2564 = vmatpush1.bf16.msra.mxu0 %v1926
        %2565 = vmatprep.subr.bf16.mxu0 %v1931
        %2566 = vmatpush1.bf16.msra.mxu0 %v1930
        %2567 = vmatprep.subr.bf16.mxu0 %v1935
        %2568 = vmatpush1.bf16.msra.mxu0 %v1934
        %2569 = vmatprep.subr.bf16.mxu0 %v1939
        %2570 = vmatpush1.bf16.msra.mxu0 %v1938
        %2571 = vmatprep.subr.bf16.mxu0 %v1943
        %2572 = vmatpush1.bf16.msra.mxu0 %v1942
        %2573 = vmatprep.subr.bf16.mxu0 %v1947
        %2574 = vmatpush1.bf16.msra.mxu0 %v1946
        %2575 = vmatprep.subr.bf16.mxu0 %v1951
        %2576 = vmatpush1.bf16.msra.mxu0 %v1950
        %2577 = vmatprep.subr.bf16.mxu0 %v1955
        %2578 = vmatpush1.bf16.msra.mxu0 %v1954
        %2579 = vmatprep.subr.bf16.mxu0 %v1959
        %2580 = vmatpush1.bf16.msra.mxu0 %v1958
        %2581 = vmatprep.mubr.bf16.mxu0 %v781
        %2582 = vmatmul.mubr.bf16.gmra.mrb[0].mxu0 %v780
        %v2583 = vpop.f32.mrb[0].mxu0
        %v2584 = vadd.f32 %v2543, %v2583
        %v2585 = vpop.f32.mrb[0].mxu0
        %v2586 = vadd.f32 %v2545, %v2585
        %v2587 = vpop.f32.mrb[0].mxu0
        %v2588 = vpop.f32.mrb[0].mxu0
        %2589 = vdwg.mxu0
        %2590 = vmatprep.subr.bf16.mxu0 %v1963
        %2591 = vmatpush1.bf16.msra.mxu0 %v1962
        %2592 = vmatprep.subr.bf16.mxu0 %v1967
        %2593 = vmatpush1.bf16.msra.mxu0 %v1966
        %2594 = vmatprep.subr.bf16.mxu0 %v1971
        %2595 = vmatpush1.bf16.msra.mxu0 %v1970
        %2596 = vmatprep.subr.bf16.mxu0 %v1975
        %2597 = vmatpush1.bf16.msra.mxu0 %v1974
        %2598 = vmatprep.subr.bf16.mxu0 %v1979
        %2599 = vmatpush1.bf16.msra.mxu0 %v1978
        %2600 = vmatprep.subr.bf16.mxu0 %v1983
        %2601 = vmatpush1.bf16.msra.mxu0 %v1982
        %2602 = vmatprep.subr.bf16.mxu0 %v1987
        %2603 = vmatpush1.bf16.msra.mxu0 %v1986
        %2604 = vmatprep.subr.bf16.mxu0 %v1991
        %2605 = vmatpush1.bf16.msra.mxu0 %v1990
        %2606 = vmatprep.subr.bf16.mxu0 %v1995
        %2607 = vmatpush1.bf16.msra.mxu0 %v1994
        %2608 = vmatprep.subr.bf16.mxu0 %v1999
        %2609 = vmatpush1.bf16.msra.mxu0 %v1998
        %2610 = vmatprep.subr.bf16.mxu0 %v2003
        %2611 = vmatpush1.bf16.msra.mxu0 %v2002
        %2612 = vmatprep.subr.bf16.mxu0 %v2007
        %2613 = vmatpush1.bf16.msra.mxu0 %v2006
        %2614 = vmatprep.subr.bf16.mxu0 %v2011
        %2615 = vmatpush1.bf16.msra.mxu0 %v2010
        %2616 = vmatprep.subr.bf16.mxu0 %v2015
        %2617 = vmatpush1.bf16.msra.mxu0 %v2014
        %2618 = vmatprep.subr.bf16.mxu0 %v2019
        %2619 = vmatpush1.bf16.msra.mxu0 %v2018
        %2620 = vmatprep.subr.bf16.mxu0 %v2023
        %2621 = vmatpush1.bf16.msra.mxu0 %v2022
        %2622 = vmatprep.mubr.bf16.mxu0 %v783
        %2623 = vmatmul.mubr.bf16.gmra.mrb[0].mxu0 %v782
        %v2624 = vpop.f32.mrb[0].mxu0
        %v2625 = vadd.f32 %v2584, %v2624
        %v2626 = vpop.f32.mrb[0].mxu0
        %v2627 = vadd.f32 %v2586, %v2626
        %v2628 = vpop.f32.mrb[0].mxu0
        %v2629 = vpop.f32.mrb[0].mxu0
        %2630 = vdwg.mxu0
        %2631 = vmatprep.subr.bf16.mxu0 %v2027
        %2632 = vmatpush1.bf16.msra.mxu0 %v2026
        %2633 = vmatprep.subr.bf16.mxu0 %v2031
        %2634 = vmatpush1.bf16.msra.mxu0 %v2030
        %2635 = vmatprep.subr.bf16.mxu0 %v2035
        %2636 = vmatpush1.bf16.msra.mxu0 %v2034
        %2637 = vmatprep.subr.bf16.mxu0 %v2039
        %2638 = vmatpush1.bf16.msra.mxu0 %v2038
        %2639 = vmatprep.subr.bf16.mxu0 %v2043
        %2640 = vmatpush1.bf16.msra.mxu0 %v2042
        %2641 = vmatprep.subr.bf16.mxu0 %v2047
        %2642 = vmatpush1.bf16.msra.mxu0 %v2046
        %2643 = vmatprep.subr.bf16.mxu0 %v2051
        %2644 = vmatpush1.bf16.msra.mxu0 %v2050
        %2645 = vmatprep.subr.bf16.mxu0 %v2055
        %2646 = vmatpush1.bf16.msra.mxu0 %v2054
        %2647 = vmatprep.subr.bf16.mxu0 %v2059
        %2648 = vmatpush1.bf16.msra.mxu0 %v2058
        %2649 = vmatprep.subr.bf16.mxu0 %v2063
        %2650 = vmatpush1.bf16.msra.mxu0 %v2062
        %2651 = vmatprep.subr.bf16.mxu0 %v2067
        %2652 = vmatpush1.bf16.msra.mxu0 %v2066
        %2653 = vmatprep.subr.bf16.mxu0 %v2071
        %2654 = vmatpush1.bf16.msra.mxu0 %v2070
        %2655 = vmatprep.subr.bf16.mxu0 %v2075
        %2656 = vmatpush1.bf16.msra.mxu0 %v2074
        %2657 = vmatprep.subr.bf16.mxu0 %v2079
        %2658 = vmatpush1.bf16.msra.mxu0 %v2078
        %2659 = vmatprep.subr.bf16.mxu0 %v2083
        %2660 = vmatpush1.bf16.msra.mxu0 %v2082
        %2661 = vmatprep.subr.bf16.mxu0 %v2087
        %2662 = vmatpush1.bf16.msra.mxu0 %v2086
        %2663 = vmatprep.mubr.bf16.mxu0 %v785
        %2664 = vmatmul.mubr.bf16.gmra.mrb[0].mxu0 %v784
        %v2665 = vpop.f32.mrb[0].mxu0
        %v2666 = vadd.f32 %v2625, %v2665
        %v2667 = vpop.f32.mrb[0].mxu0
        %v2668 = vadd.f32 %v2627, %v2667
        %v2669 = vpop.f32.mrb[0].mxu0
        %v2670 = vpop.f32.mrb[0].mxu0
        %2671 = vdwg.mxu0
        %v2672 = vmax.f32 %v2502, 0.0
        %v2673 = vmax.f32 %v2504, 0.0
        %v2674 = vmax.f32 %v2666, 0.0
        %v2675 = vmax.f32 %v2668, 0.0
        %v2676 = vpack.c.bf16 %v2672, %v2672
        %v2677 = vpack.c.bf16 %v2673, %v2673
        %v2678 = vpack.c.bf16 %v2674, %v2674
        %v2679 = vpack.c.bf16 %v2675, %v2675
        %v2680 = vld [vmem:[#allocation9] sm:$0xff]
        %v2681 = vld [vmem:[#allocation9 + $0x8] sm:$0xff]
        %v2682 = vld [vmem:[#allocation9 + $0x10] sm:$0xff]
        %v2683 = vld [vmem:[#allocation9 + $0x18] sm:$0xff]
        %v2684 = vld [vmem:[#allocation9 + $0x20] sm:$0xff]
        %v2685 = vld [vmem:[#allocation9 + $0x28] sm:$0xff]
        %v2686 = vld [vmem:[#allocation9 + $0x30] sm:$0xff]
        %v2687 = vld [vmem:[#allocation9 + $0x38] sm:$0xff]
        %v2688 = vld [vmem:[#allocation9 + $0x40] sm:$0xff]
        %v2689 = vld [vmem:[#allocation9 + $0x48] sm:$0xff]
        %v2690 = vld [vmem:[#allocation9 + $0x50] sm:$0xff]
        %v2691 = vld [vmem:[#allocation9 + $0x58] sm:$0xff]
        %v2692 = vld [vmem:[#allocation9 + $0x60] sm:$0xff]
        %v2693 = vld [vmem:[#allocation9 + $0x68] sm:$0xff]
        %v2694 = vld [vmem:[#allocation9 + $0x70] sm:$0xff]
        %v2695 = vld [vmem:[#allocation9 + $0x78] sm:$0xff]
        %v2696 = vld [vmem:[#allocation9 + $0x80] sm:$0xff]
        %v2697 = vld [vmem:[#allocation9 + $0x88] sm:$0xff]
        %v2698 = vld [vmem:[#allocation9 + $0x90] sm:$0xff]
        %v2699 = vld [vmem:[#allocation9 + $0x98] sm:$0xff]
        %v2700 = vld [vmem:[#allocation9 + $0xa0] sm:$0xff]
        %v2701 = vld [vmem:[#allocation9 + $0xa8] sm:$0xff]
        %v2702 = vld [vmem:[#allocation9 + $0xb0] sm:$0xff]
        %v2703 = vld [vmem:[#allocation9 + $0xb8] sm:$0xff]
        %v2704 = vld [vmem:[#allocation9 + $0xc0] sm:$0xff]
        %v2705 = vld [vmem:[#allocation9 + $0xc8] sm:$0xff]
        %v2706 = vld [vmem:[#allocation9 + $0xd0] sm:$0xff]
        %v2707 = vld [vmem:[#allocation9 + $0xd8] sm:$0xff]
        %v2708 = vld [vmem:[#allocation9 + $0xe0] sm:$0xff]
        %v2709 = vld [vmem:[#allocation9 + $0xe8] sm:$0xff]
        %v2710 = vld [vmem:[#allocation9 + $0xf0] sm:$0xff]
        %v2711 = vld [vmem:[#allocation9 + $0xf8] sm:$0xff]
        %v2712 = vld [vmem:[#allocation9 + $0x100] sm:$0xff]
        %v2713 = vld [vmem:[#allocation9 + $0x108] sm:$0xff]
        %v2714 = vld [vmem:[#allocation9 + $0x110] sm:$0xff]
        %v2715 = vld [vmem:[#allocation9 + $0x118] sm:$0xff]
        %v2716 = vld [vmem:[#allocation9 + $0x120] sm:$0xff]
        %v2717 = vld [vmem:[#allocation9 + $0x128] sm:$0xff]
        %v2718 = vld [vmem:[#allocation9 + $0x130] sm:$0xff]
        %v2719 = vld [vmem:[#allocation9 + $0x138] sm:$0xff]
        %v2720 = vld [vmem:[#allocation9 + $0x140] sm:$0xff]
        %v2721 = vld [vmem:[#allocation9 + $0x148] sm:$0xff]
        %v2722 = vld [vmem:[#allocation9 + $0x150] sm:$0xff]
        %v2723 = vld [vmem:[#allocation9 + $0x158] sm:$0xff]
        %v2724 = vld [vmem:[#allocation9 + $0x160] sm:$0xff]
        %v2725 = vld [vmem:[#allocation9 + $0x168] sm:$0xff]
        %v2726 = vld [vmem:[#allocation9 + $0x170] sm:$0xff]
        %v2727 = vld [vmem:[#allocation9 + $0x178] sm:$0xff]
        %v2728 = vld [vmem:[#allocation9 + $0x180] sm:$0xff]
        %v2729 = vld [vmem:[#allocation9 + $0x188] sm:$0xff]
        %v2730 = vld [vmem:[#allocation9 + $0x190] sm:$0xff]
        %v2731 = vld [vmem:[#allocation9 + $0x198] sm:$0xff]
        %v2732 = vld [vmem:[#allocation9 + $0x1a0] sm:$0xff]
        %v2733 = vld [vmem:[#allocation9 + $0x1a8] sm:$0xff]
        %v2734 = vld [vmem:[#allocation9 + $0x1b0] sm:$0xff]
        %v2735 = vld [vmem:[#allocation9 + $0x1b8] sm:$0xff]
        %v2736 = vld [vmem:[#allocation9 + $0x1c0] sm:$0xff]
        %v2737 = vld [vmem:[#allocation9 + $0x1c8] sm:$0xff]
        %v2738 = vld [vmem:[#allocation9 + $0x1d0] sm:$0xff]
        %v2739 = vld [vmem:[#allocation9 + $0x1d8] sm:$0xff]
        %v2740 = vld [vmem:[#allocation9 + $0x1e0] sm:$0xff]
        %v2741 = vld [vmem:[#allocation9 + $0x1e8] sm:$0xff]
        %v2742 = vld [vmem:[#allocation9 + $0x1f0] sm:$0xff]
        %v2743 = vld [vmem:[#allocation9 + $0x1f8] sm:$0xff]
        %v2744 = vld [vmem:[%s6] sm:$0x3]
        %v2746 = vlaneseq
        %v2747 = vshrl.u32 %v2746, 7
        %v2748 = vsub.s32 0, %v2747
        %v2749 = vrot.slane %v2744, %v2748
        %v2750 = vlaneseq
        %v2751 = vshrl.u32 %v2750, 7
        %v2752 = vsub.s32 1, %v2751
        %v2753 = vrot.slane %v2744, %v2752
        %v2820 = vunpack.c.l.b16 %v2680
        %v2821 = vunpack.c.h.b16 %v2680
        %v2822 = vunpack.c.l.b16 %v2681
        %v2823 = vunpack.c.h.b16 %v2681
        %v2824 = vunpack.c.l.b16 %v2682
        %v2825 = vunpack.c.h.b16 %v2682
        %v2826 = vunpack.c.l.b16 %v2683
        %v2827 = vunpack.c.h.b16 %v2683
        %v2828 = vunpack.c.l.b16 %v2684
        %v2829 = vunpack.c.h.b16 %v2684
        %v2830 = vunpack.c.l.b16 %v2685
        %v2831 = vunpack.c.h.b16 %v2685
        %v2832 = vunpack.c.l.b16 %v2686
        %v2833 = vunpack.c.h.b16 %v2686
        %v2834 = vunpack.c.l.b16 %v2687
        %v2835 = vunpack.c.h.b16 %v2687
        %v2836 = vunpack.c.l.b16 %v2688
        %v2837 = vunpack.c.h.b16 %v2688
        %v2838 = vunpack.c.l.b16 %v2689
        %v2839 = vunpack.c.h.b16 %v2689
        %v2840 = vunpack.c.l.b16 %v2690
        %v2841 = vunpack.c.h.b16 %v2690
        %v2842 = vunpack.c.l.b16 %v2691
        %v2843 = vunpack.c.h.b16 %v2691
        %v2844 = vunpack.c.l.b16 %v2692
        %v2845 = vunpack.c.h.b16 %v2692
        %v2846 = vunpack.c.l.b16 %v2693
        %v2847 = vunpack.c.h.b16 %v2693
        %v2848 = vunpack.c.l.b16 %v2694
        %v2849 = vunpack.c.h.b16 %v2694
        %v2850 = vunpack.c.l.b16 %v2695
        %v2851 = vunpack.c.h.b16 %v2695
        %v2852 = vunpack.c.l.b16 %v2696
        %v2853 = vunpack.c.h.b16 %v2696
        %v2854 = vunpack.c.l.b16 %v2697
        %v2855 = vunpack.c.h.b16 %v2697
        %v2856 = vunpack.c.l.b16 %v2698
        %v2857 = vunpack.c.h.b16 %v2698
        %v2858 = vunpack.c.l.b16 %v2699
        %v2859 = vunpack.c.h.b16 %v2699
        %v2860 = vunpack.c.l.b16 %v2700
        %v2861 = vunpack.c.h.b16 %v2700
        %v2862 = vunpack.c.l.b16 %v2701
        %v2863 = vunpack.c.h.b16 %v2701
        %v2864 = vunpack.c.l.b16 %v2702
        %v2865 = vunpack.c.h.b16 %v2702
        %v2866 = vunpack.c.l.b16 %v2703
        %v2867 = vunpack.c.h.b16 %v2703
        %v2868 = vunpack.c.l.b16 %v2704
        %v2869 = vunpack.c.h.b16 %v2704
        %v2870 = vunpack.c.l.b16 %v2705
        %v2871 = vunpack.c.h.b16 %v2705
        %v2872 = vunpack.c.l.b16 %v2706
        %v2873 = vunpack.c.h.b16 %v2706
        %v2874 = vunpack.c.l.b16 %v2707
        %v2875 = vunpack.c.h.b16 %v2707
        %v2876 = vunpack.c.l.b16 %v2708
        %v2877 = vunpack.c.h.b16 %v2708
        %v2878 = vunpack.c.l.b16 %v2709
        %v2879 = vunpack.c.h.b16 %v2709
        %v2880 = vunpack.c.l.b16 %v2710
        %v2881 = vunpack.c.h.b16 %v2710
        %v2882 = vunpack.c.l.b16 %v2711
        %v2883 = vunpack.c.h.b16 %v2711
        %v2884 = vunpack.c.l.b16 %v2712
        %v2885 = vunpack.c.h.b16 %v2712
        %v2886 = vunpack.c.l.b16 %v2713
        %v2887 = vunpack.c.h.b16 %v2713
        %v2888 = vunpack.c.l.b16 %v2714
        %v2889 = vunpack.c.h.b16 %v2714
        %v2890 = vunpack.c.l.b16 %v2715
        %v2891 = vunpack.c.h.b16 %v2715
        %v2892 = vunpack.c.l.b16 %v2716
        %v2893 = vunpack.c.h.b16 %v2716
        %v2894 = vunpack.c.l.b16 %v2717
        %v2895 = vunpack.c.h.b16 %v2717
        %v2896 = vunpack.c.l.b16 %v2718
        %v2897 = vunpack.c.h.b16 %v2718
        %v2898 = vunpack.c.l.b16 %v2719
        %v2899 = vunpack.c.h.b16 %v2719
        %v2900 = vunpack.c.l.b16 %v2720
        %v2901 = vunpack.c.h.b16 %v2720
        %v2902 = vunpack.c.l.b16 %v2721
        %v2903 = vunpack.c.h.b16 %v2721
        %v2904 = vunpack.c.l.b16 %v2722
        %v2905 = vunpack.c.h.b16 %v2722
        %v2906 = vunpack.c.l.b16 %v2723
        %v2907 = vunpack.c.h.b16 %v2723
        %v2908 = vunpack.c.l.b16 %v2724
        %v2909 = vunpack.c.h.b16 %v2724
        %v2910 = vunpack.c.l.b16 %v2725
        %v2911 = vunpack.c.h.b16 %v2725
        %v2912 = vunpack.c.l.b16 %v2726
        %v2913 = vunpack.c.h.b16 %v2726
        %v2914 = vunpack.c.l.b16 %v2727
        %v2915 = vunpack.c.h.b16 %v2727
        %v2916 = vunpack.c.l.b16 %v2728
        %v2917 = vunpack.c.h.b16 %v2728
        %v2918 = vunpack.c.l.b16 %v2729
        %v2919 = vunpack.c.h.b16 %v2729
        %v2920 = vunpack.c.l.b16 %v2730
        %v2921 = vunpack.c.h.b16 %v2730
        %v2922 = vunpack.c.l.b16 %v2731
        %v2923 = vunpack.c.h.b16 %v2731
        %v2924 = vunpack.c.l.b16 %v2732
        %v2925 = vunpack.c.h.b16 %v2732
        %v2926 = vunpack.c.l.b16 %v2733
        %v2927 = vunpack.c.h.b16 %v2733
        %v2928 = vunpack.c.l.b16 %v2734
        %v2929 = vunpack.c.h.b16 %v2734
        %v2930 = vunpack.c.l.b16 %v2735
        %v2931 = vunpack.c.h.b16 %v2735
        %v2932 = vunpack.c.l.b16 %v2736
        %v2933 = vunpack.c.h.b16 %v2736
        %v2934 = vunpack.c.l.b16 %v2737
        %v2935 = vunpack.c.h.b16 %v2737
        %v2936 = vunpack.c.l.b16 %v2738
        %v2937 = vunpack.c.h.b16 %v2738
        %v2938 = vunpack.c.l.b16 %v2739
        %v2939 = vunpack.c.h.b16 %v2739
        %v2940 = vunpack.c.l.b16 %v2740
        %v2941 = vunpack.c.h.b16 %v2740
        %v2942 = vunpack.c.l.b16 %v2741
        %v2943 = vunpack.c.h.b16 %v2741
        %v2944 = vunpack.c.l.b16 %v2742
        %v2945 = vunpack.c.h.b16 %v2742
        %v2946 = vunpack.c.l.b16 %v2743
        %v2947 = vunpack.c.h.b16 %v2743
        %v2948 = vpack.c.b16 %v2822, %v2820
        %v2949 = vpack.c.b16 %v2823, %v2821
        %v2950 = vpack.c.b16 %v2826, %v2824
        %v2951 = vpack.c.b16 %v2827, %v2825
        %v2952 = vpack.c.b16 %v2830, %v2828
        %v2953 = vpack.c.b16 %v2831, %v2829
        %v2954 = vpack.c.b16 %v2834, %v2832
        %v2955 = vpack.c.b16 %v2835, %v2833
        %v2956 = vpack.c.b16 %v2838, %v2836
        %v2957 = vpack.c.b16 %v2839, %v2837
        %v2958 = vpack.c.b16 %v2842, %v2840
        %v2959 = vpack.c.b16 %v2843, %v2841
        %v2960 = vpack.c.b16 %v2846, %v2844
        %v2961 = vpack.c.b16 %v2847, %v2845
        %v2962 = vpack.c.b16 %v2850, %v2848
        %v2963 = vpack.c.b16 %v2851, %v2849
        %v2964 = vpack.c.b16 %v2854, %v2852
        %v2965 = vpack.c.b16 %v2855, %v2853
        %v2966 = vpack.c.b16 %v2858, %v2856
        %v2967 = vpack.c.b16 %v2859, %v2857
        %v2968 = vpack.c.b16 %v2862, %v2860
        %v2969 = vpack.c.b16 %v2863, %v2861
        %v2970 = vpack.c.b16 %v2866, %v2864
        %v2971 = vpack.c.b16 %v2867, %v2865
        %v2972 = vpack.c.b16 %v2870, %v2868
        %v2973 = vpack.c.b16 %v2871, %v2869
        %v2974 = vpack.c.b16 %v2874, %v2872
        %v2975 = vpack.c.b16 %v2875, %v2873
        %v2976 = vpack.c.b16 %v2878, %v2876
        %v2977 = vpack.c.b16 %v2879, %v2877
        %v2978 = vpack.c.b16 %v2882, %v2880
        %v2979 = vpack.c.b16 %v2883, %v2881
        %v2980 = vpack.c.b16 %v2886, %v2884
        %v2981 = vpack.c.b16 %v2887, %v2885
        %v2982 = vpack.c.b16 %v2890, %v2888
        %v2983 = vpack.c.b16 %v2891, %v2889
        %v2984 = vpack.c.b16 %v2894, %v2892
        %v2985 = vpack.c.b16 %v2895, %v2893
        %v2986 = vpack.c.b16 %v2898, %v2896
        %v2987 = vpack.c.b16 %v2899, %v2897
        %v2988 = vpack.c.b16 %v2902, %v2900
        %v2989 = vpack.c.b16 %v2903, %v2901
        %v2990 = vpack.c.b16 %v2906, %v2904
        %v2991 = vpack.c.b16 %v2907, %v2905
        %v2992 = vpack.c.b16 %v2910, %v2908
        %v2993 = vpack.c.b16 %v2911, %v2909
        %v2994 = vpack.c.b16 %v2914, %v2912
        %v2995 = vpack.c.b16 %v2915, %v2913
        %v2996 = vpack.c.b16 %v2918, %v2916
        %v2997 = vpack.c.b16 %v2919, %v2917
        %v2998 = vpack.c.b16 %v2922, %v2920
        %v2999 = vpack.c.b16 %v2923, %v2921
        %v3000 = vpack.c.b16 %v2926, %v2924
        %v3001 = vpack.c.b16 %v2927, %v2925
        %v3002 = vpack.c.b16 %v2930, %v2928
        %v3003 = vpack.c.b16 %v2931, %v2929
        %v3004 = vpack.c.b16 %v2934, %v2932
        %v3005 = vpack.c.b16 %v2935, %v2933
        %v3006 = vpack.c.b16 %v2938, %v2936
        %v3007 = vpack.c.b16 %v2939, %v2937
        %v3008 = vpack.c.b16 %v2942, %v2940
        %v3009 = vpack.c.b16 %v2943, %v2941
        %v3010 = vpack.c.b16 %v2946, %v2944
        %v3011 = vpack.c.b16 %v2947, %v2945
        %3076 = vmatprep.subr.bf16.mxu0 %v2949
        %3077 = vmatpush1.bf16.msra.mxu0 %v2948
        %3078 = vmatprep.subr.bf16.mxu0 %v2951
        %3079 = vmatpush1.bf16.msra.mxu0 %v2950
        %3080 = vmatprep.subr.bf16.mxu0 %v2953
        %3081 = vmatpush1.bf16.msra.mxu0 %v2952
        %3082 = vmatprep.subr.bf16.mxu0 %v2955
        %3083 = vmatpush1.bf16.msra.mxu0 %v2954
        %3084 = vmatprep.subr.bf16.mxu0 %v2957
        %3085 = vmatpush1.bf16.msra.mxu0 %v2956
        %3086 = vmatprep.subr.bf16.mxu0 %v2959
        %3087 = vmatpush1.bf16.msra.mxu0 %v2958
        %3088 = vmatprep.subr.bf16.mxu0 %v2961
        %3089 = vmatpush1.bf16.msra.mxu0 %v2960
        %3090 = vmatprep.subr.bf16.mxu0 %v2963
        %3091 = vmatpush1.bf16.msra.mxu0 %v2962
        %3092 = vmatprep.subr.bf16.mxu0 %v2965
        %3093 = vmatpush1.bf16.msra.mxu0 %v2964
        %3094 = vmatprep.subr.bf16.mxu0 %v2967
        %3095 = vmatpush1.bf16.msra.mxu0 %v2966
        %3096 = vmatprep.subr.bf16.mxu0 %v2969
        %3097 = vmatpush1.bf16.msra.mxu0 %v2968
        %3098 = vmatprep.subr.bf16.mxu0 %v2971
        %3099 = vmatpush1.bf16.msra.mxu0 %v2970
        %3100 = vmatprep.subr.bf16.mxu0 %v2973
        %3101 = vmatpush1.bf16.msra.mxu0 %v2972
        %3102 = vmatprep.subr.bf16.mxu0 %v2975
        %3103 = vmatpush1.bf16.msra.mxu0 %v2974
        %3104 = vmatprep.subr.bf16.mxu0 %v2977
        %3105 = vmatpush1.bf16.msra.mxu0 %v2976
        %3106 = vmatprep.subr.bf16.mxu0 %v2979
        %3107 = vmatpush1.bf16.msra.mxu0 %v2978
        %3108 = vmatprep.mubr.bf16.mxu0 %v2677
        %3109 = vmatmul.mubr.bf16.gmra.mrb[0].mxu0 %v2676
        %v3110 = vpop.f32.mrb[0].mxu0
        %v3111 = vadd.f32 %v2749, %v3110
        %v3112 = vpop.f32.mrb[0].mxu0
        %v3113 = vadd.f32 %v2753, %v3112
        %v3114 = vpop.f32.mrb[0].mxu0
        %v3115 = vpop.f32.mrb[0].mxu0
        %3116 = vdwg.mxu0
        %3117 = vmatprep.subr.bf16.mxu0 %v2981
        %3118 = vmatpush1.bf16.msra.mxu0 %v2980
        %3119 = vmatprep.subr.bf16.mxu0 %v2983
        %3120 = vmatpush1.bf16.msra.mxu0 %v2982
        %3121 = vmatprep.subr.bf16.mxu0 %v2985
        %3122 = vmatpush1.bf16.msra.mxu0 %v2984
        %3123 = vmatprep.subr.bf16.mxu0 %v2987
        %3124 = vmatpush1.bf16.msra.mxu0 %v2986
        %3125 = vmatprep.subr.bf16.mxu0 %v2989
        %3126 = vmatpush1.bf16.msra.mxu0 %v2988
        %3127 = vmatprep.subr.bf16.mxu0 %v2991
        %3128 = vmatpush1.bf16.msra.mxu0 %v2990
        %3129 = vmatprep.subr.bf16.mxu0 %v2993
        %3130 = vmatpush1.bf16.msra.mxu0 %v2992
        %3131 = vmatprep.subr.bf16.mxu0 %v2995
        %3132 = vmatpush1.bf16.msra.mxu0 %v2994
        %3133 = vmatprep.subr.bf16.mxu0 %v2997
        %3134 = vmatpush1.bf16.msra.mxu0 %v2996
        %3135 = vmatprep.subr.bf16.mxu0 %v2999
        %3136 = vmatpush1.bf16.msra.mxu0 %v2998
        %3137 = vmatprep.subr.bf16.mxu0 %v3001
        %3138 = vmatpush1.bf16.msra.mxu0 %v3000
        %3139 = vmatprep.subr.bf16.mxu0 %v3003
        %3140 = vmatpush1.bf16.msra.mxu0 %v3002
        %3141 = vmatprep.subr.bf16.mxu0 %v3005
        %3142 = vmatpush1.bf16.msra.mxu0 %v3004
        %3143 = vmatprep.subr.bf16.mxu0 %v3007
        %3144 = vmatpush1.bf16.msra.mxu0 %v3006
        %3145 = vmatprep.subr.bf16.mxu0 %v3009
        %3146 = vmatpush1.bf16.msra.mxu0 %v3008
        %3147 = vmatprep.subr.bf16.mxu0 %v3011
        %3148 = vmatpush1.bf16.msra.mxu0 %v3010
        %3149 = vmatprep.mubr.bf16.mxu0 %v2679
        %3150 = vmatmul.mubr.bf16.gmra.mrb[0].mxu0 %v2678
        %v3151 = vpop.f32.mrb[0].mxu0
        %v3152 = vadd.f32 %v3111, %v3151
        %v3153 = vpop.f32.mrb[0].mxu0
        %v3154 = vadd.f32 %v3113, %v3153
        %v3155 = vpop.f32.mrb[0].mxu0
        %v3156 = vpop.f32.mrb[0].mxu0
        %3157 = vdwg.mxu0
        %v3158 = vmax.f32 %v3152, 0.0
        %v3159 = vmax.f32 %v3154, 0.0
        %v3160 = vpack.c.bf16 %v3158, %v3158
        %v3161 = vpack.c.bf16 %v3159, %v3159
        %v3162 = vld [vmem:[#allocation11] sm:$0xf]
        %v3163 = vld [vmem:[#allocation11 + $0x4] sm:$0xf]
        %v3164 = vld [vmem:[#allocation11 + $0x8] sm:$0xf]
        %v3165 = vld [vmem:[#allocation11 + $0xc] sm:$0xf]
        %v3166 = vld [vmem:[#allocation11 + $0x10] sm:$0xf]
        %v3167 = vld [vmem:[#allocation11 + $0x14] sm:$0xf]
        %v3168 = vld [vmem:[#allocation11 + $0x18] sm:$0xf]
        %v3169 = vld [vmem:[#allocation11 + $0x1c] sm:$0xf]
        %v3170 = vld [vmem:[#allocation11 + $0x20] sm:$0xf]
        %v3171 = vld [vmem:[#allocation11 + $0x24] sm:$0xf]
        %v3172 = vld [vmem:[#allocation11 + $0x28] sm:$0xf]
        %v3173 = vld [vmem:[#allocation11 + $0x2c] sm:$0xf]
        %v3174 = vld [vmem:[#allocation11 + $0x30] sm:$0xf]
        %v3175 = vld [vmem:[#allocation11 + $0x34] sm:$0xf]
        %v3176 = vld [vmem:[#allocation11 + $0x38] sm:$0xf]
        %v3177 = vld [vmem:[#allocation11 + $0x3c] sm:$0xf]
        %v3178 = vld [vmem:[#allocation11 + $0x40] sm:$0xf]
        %v3179 = vld [vmem:[#allocation11 + $0x44] sm:$0xf]
        %v3180 = vld [vmem:[#allocation11 + $0x48] sm:$0xf]
        %v3181 = vld [vmem:[#allocation11 + $0x4c] sm:$0xf]
        %v3182 = vld [vmem:[#allocation11 + $0x50] sm:$0xf]
        %v3183 = vld [vmem:[#allocation11 + $0x54] sm:$0xf]
        %v3184 = vld [vmem:[#allocation11 + $0x58] sm:$0xf]
        %v3185 = vld [vmem:[#allocation11 + $0x5c] sm:$0xf]
        %v3186 = vld [vmem:[#allocation11 + $0x60] sm:$0xf]
        %v3187 = vld [vmem:[#allocation11 + $0x64] sm:$0xf]
        %v3188 = vld [vmem:[#allocation11 + $0x68] sm:$0xf]
        %v3189 = vld [vmem:[#allocation11 + $0x6c] sm:$0xf]
        %v3190 = vld [vmem:[#allocation11 + $0x70] sm:$0xf]
        %v3191 = vld [vmem:[#allocation11 + $0x74] sm:$0xf]
        %v3192 = vld [vmem:[#allocation11 + $0x78] sm:$0xf]
        %v3193 = vld [vmem:[#allocation11 + $0x7c] sm:$0xf]
        %v3194 = vld [vmem:[%s8] sm:$0x1]
        %v3196 = vlaneseq
        %v3197 = vshrl.u32 %v3196, 7
        %v3198 = vsub.s32 0, %v3197
        %v3199 = vrot.slane %v3194, %v3198
        %v3233 = vunpack.c.l.b16 %v3162
        %v3234 = vunpack.c.l.b16 %v3163
        %v3235 = vunpack.c.l.b16 %v3164
        %v3236 = vunpack.c.l.b16 %v3165
        %v3237 = vunpack.c.l.b16 %v3166
        %v3238 = vunpack.c.l.b16 %v3167
        %v3239 = vunpack.c.l.b16 %v3168
        %v3240 = vunpack.c.l.b16 %v3169
        %v3241 = vunpack.c.l.b16 %v3170
        %v3242 = vunpack.c.l.b16 %v3171
        %v3243 = vunpack.c.l.b16 %v3172
        %v3244 = vunpack.c.l.b16 %v3173
        %v3245 = vunpack.c.l.b16 %v3174
        %v3246 = vunpack.c.l.b16 %v3175
        %v3247 = vunpack.c.l.b16 %v3176
        %v3248 = vunpack.c.l.b16 %v3177
        %v3249 = vunpack.c.l.b16 %v3178
        %v3250 = vunpack.c.l.b16 %v3179
        %v3251 = vunpack.c.l.b16 %v3180
        %v3252 = vunpack.c.l.b16 %v3181
        %v3253 = vunpack.c.l.b16 %v3182
        %v3254 = vunpack.c.l.b16 %v3183
        %v3255 = vunpack.c.l.b16 %v3184
        %v3256 = vunpack.c.l.b16 %v3185
        %v3257 = vunpack.c.l.b16 %v3186
        %v3258 = vunpack.c.l.b16 %v3187
        %v3259 = vunpack.c.l.b16 %v3188
        %v3260 = vunpack.c.l.b16 %v3189
        %v3261 = vunpack.c.l.b16 %v3190
        %v3262 = vunpack.c.l.b16 %v3191
        %v3263 = vunpack.c.l.b16 %v3192
        %v3264 = vunpack.c.l.b16 %v3193
        %v3265 = vpack.c.b16 %v3234, %v3233
        %v3266 = vpack.c.b16 %v3236, %v3235
        %v3267 = vpack.c.b16 %v3238, %v3237
        %v3268 = vpack.c.b16 %v3240, %v3239
        %v3269 = vpack.c.b16 %v3242, %v3241
        %v3270 = vpack.c.b16 %v3244, %v3243
        %v3271 = vpack.c.b16 %v3246, %v3245
        %v3272 = vpack.c.b16 %v3248, %v3247
        %v3273 = vpack.c.b16 %v3250, %v3249
        %v3274 = vpack.c.b16 %v3252, %v3251
        %v3275 = vpack.c.b16 %v3254, %v3253
        %v3276 = vpack.c.b16 %v3256, %v3255
        %v3277 = vpack.c.b16 %v3258, %v3257
        %v3278 = vpack.c.b16 %v3260, %v3259
        %v3279 = vpack.c.b16 %v3262, %v3261
        %v3280 = vpack.c.b16 %v3264, %v3263
        %3297 = vmatprep.subr.bf16.mxu0 0
        %3298 = vmatpush1.bf16.msra.mxu0 %v3265
        %3299 = vmatprep.subr.bf16.mxu0 0
        %3300 = vmatpush1.bf16.msra.mxu0 %v3266
        %3301 = vmatprep.subr.bf16.mxu0 0
        %3302 = vmatpush1.bf16.msra.mxu0 %v3267
        %3303 = vmatprep.subr.bf16.mxu0 0
        %3304 = vmatpush1.bf16.msra.mxu0 %v3268
        %3305 = vmatprep.subr.bf16.mxu0 0
        %3306 = vmatpush1.bf16.msra.mxu0 %v3269
        %3307 = vmatprep.subr.bf16.mxu0 0
        %3308 = vmatpush1.bf16.msra.mxu0 %v3270
        %3309 = vmatprep.subr.bf16.mxu0 0
        %3310 = vmatpush1.bf16.msra.mxu0 %v3271
        %3311 = vmatprep.subr.bf16.mxu0 0
        %3312 = vmatpush1.bf16.msra.mxu0 %v3272
        %3313 = vmatprep.subr.bf16.mxu0 0
        %3314 = vmatpush1.bf16.msra.mxu0 %v3273
        %3315 = vmatprep.subr.bf16.mxu0 0
        %3316 = vmatpush1.bf16.msra.mxu0 %v3274
        %3317 = vmatprep.subr.bf16.mxu0 0
        %3318 = vmatpush1.bf16.msra.mxu0 %v3275
        %3319 = vmatprep.subr.bf16.mxu0 0
        %3320 = vmatpush1.bf16.msra.mxu0 %v3276
        %3321 = vmatprep.subr.bf16.mxu0 0
        %3322 = vmatpush1.bf16.msra.mxu0 %v3277
        %3323 = vmatprep.subr.bf16.mxu0 0
        %3324 = vmatpush1.bf16.msra.mxu0 %v3278
        %3325 = vmatprep.subr.bf16.mxu0 0
        %3326 = vmatpush1.bf16.msra.mxu0 %v3279
        %3327 = vmatprep.subr.bf16.mxu0 0
        %3328 = vmatpush1.bf16.msra.mxu0 %v3280
        %3329 = vmatprep.mubr.bf16.mxu0 %v3161
        %3330 = vmatmul.mubr.bf16.gmra.mrb[0].mxu0 %v3160
        %v3331 = vpop.f32.mrb[0].mxu0
        %v3332 = vadd.f32 %v3199, %v3331
        %v3333 = vpop.f32.mrb[0].mxu0
        %v3334 = vpop.f32.mrb[0].mxu0
        %v3335 = vpop.f32.mrb[0].mxu0
        %3336 = vdwg.mxu0
        %v3337 = vmax.f32 %v3332, 0.0
        %v3338 = vld [vmem:[%s9] sm:$0x1]
        %v3340 = vlaneseq
        %v3341 = vshrl.u32 %v3340, 7
        %v3342 = vsub.s32 0, %v3341
        %v3343 = vrot.slane %v3338, %v3342
        %v3345 = vmul.f32 %v3337, %v3343
        %3346 = vadd.xlane.f32.xlu0 %v3345
        %v3347 = vpop.xlane.xlu0 %3346
        %v3348 = vld [vmem:[#allocation2] sm:$0x1]
        %v3350 = vlaneseq
        %v3351 = vshrl.u32 %v3350, 7
        %v3352 = vsub.s32 0, %v3351
        %v3353 = vrot.slane %v3348, %v3352
        %v3355 = vadd.f32 %v3347, %v3353
        %3357 = vset.pattern.permute.xlu0 0
        %3358 = vperm.xlu0 %3357, %v3355
        %v3359 = vpop.permute.xlu0 %3358
        %v3360 = vlaneseq
        %v3361 = vand.u32 %v3360, 127
        %v3362 = vlaneseq
        %v3363 = vshrl.u32 %v3362, 7
        %v3364 = vsub.s32 %v3361, %v3363
        %v3365 = vrot.slane %v3359, %v3364
        %vm3367 = vcmask 57344
        %3368 = vst.msk [vmem:[%s460] sm:$0x1] %vm3367, %v3365
        %s3369 = sand.u32 %s276, 1
        %s3370 = scalar_lea.sflag [#allocation5], %s3369
        %s3371 = sand.u32 %s276, 1
        %s3372 = scalar_lea.vmem [#allocation12], %s3371
        // Predicated region
        $region85: #{tpu_custom_call.1} parent=63 // pred_check
          %p3373 = pneg %p286
        $region86: #{tpu_custom_call.1} parent=63 // pred_check_branch
          %3375 = sbr.rel (%p3373) target = $region88
        $region87: #{tpu_custom_call.1} parent=63 // pred_region
          %s3377 = ssub.s32 16, 16
          %3378 = vsyncadd %s3370, %s3377
          %s3379 = smul.addr %s32, 16
          %s3380 = scalar_lea.hbm %s11, %s3379
          %s3382 = sshll.u32 %s3372, 4
          %s3383 = int_to_ptr.vmem [resolvable:$true] %s3382
          %3385 = dma.vmem_to_hbm [thread:$0]  %s3383, 16, %s3380, %s3370
        $region88: #{tpu_custom_call.1} parent=63 // pred_fallthru
          _
      $region64: #{tpu_custom_call.1} parent=5 // pred_fallthru
        _
      %p3386 = scmp.le.s32.totalorder 2, %s27
      // Predicated region
      $region89: #{tpu_custom_call.1} parent=5 // pred_check
        %p3387 = pneg %p3386
      $region90: #{tpu_custom_call.1} parent=5 // pred_check_branch
        %3389 = sbr.rel (%p3387) target = $region92
      $region91: #{tpu_custom_call.1} parent=5 // pred_region
        %s3390 = ssub.s32 %s27, 2
        // Predicated region
        $region93: #{tpu_custom_call.1} parent=91 // pred_check
          %p3391 = pneg %p292
        $region94: #{tpu_custom_call.1} parent=91 // pred_check_branch
          %3393 = sbr.rel (%p3391) target = $region96
        $region95: #{tpu_custom_call.1} parent=91 // pred_region
          %s3394 = sand.u32 %s277, 1
          %s3395 = scalar_lea.sflag [#allocation5], %s3394
          %s3396 = sand.u32 %s277, 1
          %s3397 = scalar_lea.vmem [#allocation12], %s3396
          %3398 = dma.done %s3395, 16
        $region96: #{tpu_custom_call.1} parent=91 // pred_fallthru
          _
      $region92: #{tpu_custom_call.1} parent=5 // pred_fallthru
        _
    $region6: #{tpu_custom_call.1} parent=1 // loop_footer
      %s31 = sadd.s32 1, %s27
    $region7: #{tpu_custom_call.1} parent=1 // loop_footer_branch
      %26 = sbr.rel target = $region3
    $region8: #{tpu_custom_call.1} parent=1 // loop_exit
      _
    %3399 = vsyncpa [#allocation4], 1
    %s3400 = scalar_lea.sflag [#allocation4], 1
    %3401 = vsyncpa %s3400, 1
    %3402 = vsyncpa [#allocation7], 1
    %3403 = vsyncpa [#allocation10], 1
    %3404 = vsyncpa [#allocation5], 1
    %s3405 = scalar_lea.sflag [#allocation5], 1
    %3406 = vsyncpa %s3405, 1

</llo_original>
